<compile_context>
chip_gen: v5e
topology: v5e:2x2
jax: 0.10.0
libtpu: 0.0.40
codegen_flags: <defaults>
</compile_context>

<pallas_src>
import math
import numpy as np
import jax
import jax.numpy as jnp
from jax.experimental import pallas as pl
from jax.experimental.pallas import tpu as pltpu


_SMALL_PROBLEM_FLOPS = 1e7  # below this, a plain XLA dot beats kernel overheads


def _round_up(x, m):
    return ((x + m - 1) // m) * m


def _cdiv(a, b):
    return -(-a // b)


def _hann_window(win_length, n_fft, periodic=False):
    # NOTE(review): torch.hann_window defaults to periodic=True; the Annalisa
    # reference this port was derived from uses the symmetric (periodic=False)
    # form, which stays the default here.  Flip `periodic_window` if the original
    # module relied on the torch default.
    if win_length > 1:
        n = np.arange(win_length)
        denom = win_length if periodic else win_length - 1
        window = 0.5 - 0.5 * np.cos(2.0 * np.pi * n / denom)
    else:
        window = np.ones((win_length,))
    if n_fft > win_length:
        window = np.pad(window, (0, n_fft - win_length))
    return window.astype(np.float64)


def _istft_norm(window, hop_length, normalized):
    # Constant fold-style normalization (matches the reference); no per-sample
    # NOLA window-envelope division.
    if normalized == "energy":
        return float(np.sum(window ** 2) / hop_length)
    if normalized == "amplitude":
        return float(np.sqrt(np.sum(window ** 2)) / hop_length)
    return 1.0


def _windowed_synthesis_frame(n_fft, win_length, hop_length, normalized, periodic):
    """irfft + synthesis window + 1/norm folded into per-bin cos/sin rows.

    Returns (wcos, wsin), each [K, n_fft] float64, so that one frame's time-domain
    contribution is  sum_k  Re(X_k) * wcos[k] + Im(X_k) * wsin[k].
    """
    window = _hann_window(win_length, n_fft, periodic)
    K = n_fft // 2 + 1
    k = np.arange(K)[:, None].astype(np.float64)
    t = np.arange(n_fft)[None, :].astype(np.float64)
    ang = 2.0 * np.pi * k * t / n_fft
    scale = np.full((K, 1), 2.0 / n_fft)
    scale[0, 0] = 1.0 / n_fft
    if n_fft % 2 == 0:
        scale[-1, 0] = 1.0 / n_fft          # Nyquist bin
    inv_norm = 1.0 / _istft_norm(window, hop_length, normalized)
    wcos = np.cos(ang) * scale * window[None, :] * inv_norm
    wsin = -np.sin(ang) * scale * window[None, :] * inv_norm
    return wcos, wsin


def _make_dense_basis(n_fft, win_length, hop_length, normalized, num_frames,
                      out_length, periodic):
    """Dense O(F^2) OLA basis [F*2K, out_length]; only used for tiny problems."""
    wcos, wsin = _windowed_synthesis_frame(n_fft, win_length, hop_length,
                                           normalized, periodic)
    K = n_fft // 2 + 1
    basis = np.zeros((num_frames, 2 * K, out_length), np.float64)
    for f in range(num_frames):
        s = f * hop_length
        e = min(s + n_fft, out_length)
        basis[f, 0:2 * K:2, s:e] = wcos[:, :e - s]
        basis[f, 1:2 * K:2, s:e] = wsin[:, :e - s]
    return basis.reshape(num_frames * 2 * K, out_length).astype(np.float32)


def _make_banded_basis(n_fft, win_length, hop_length, normalized, periodic,
                       s_frames, feat_pad, tile_t):
    """Two shift-invariant banded OLA basis blocks, each [s_frames*feat_pad, tile_t].

    For an output tile starting at absolute time j*tile_t, block 0 holds the
    contributions of (zero-front-padded) frames [j*S, (j+1)*S), block 1 the next
    S frames (only its first E = ceil(n_fft/hop)-1 frames are nonzero).  Row
    layout matches the interleaved X columns: local_frame*feat_pad + 2*k (+1 imag).
    """
    wcos, wsin = _windowed_synthesis_frame(n_fft, win_length, hop_length,
                                           normalized, periodic)
    K = n_fft // 2 + 1
    E = _cdiv(n_fft, hop_length) - 1
    basis = np.zeros((2, s_frames, feat_pad, tile_t), np.float64)
    for blk in range(2):
        for r in range(s_frames):
            start = (blk * s_frames + r - E) * hop_length   # rel. to tile start
            lo, hi = max(start, 0), min(start + n_fft, tile_t)
            if hi <= lo:
                continue
            basis[blk, r, 0:2 * K:2, lo:hi] = wcos[:, lo - start:hi - start]
            basis[blk, r, 1:2 * K:2, lo:hi] = wsin[:, lo - start:hi - start]
    basis = basis.reshape(2, s_frames * feat_pad, tile_t).astype(np.float32)
    return basis[0], basis[1], E


def _banded_istft_kernel(x0_ref, x1_ref, b0_ref, b1_ref, o_ref):
    # Two lane-dense MXU matmuls per (row tile, time tile): the frames whose
    # contributions land in this TN-wide output tile live in padded frame blocks
    # j and j+1 of X.  Both basis blocks have constant block indices, so the
    # pipeline DMAs them once and keeps them resident after the first step.
    acc = jnp.dot(x0_ref[...], b0_ref[...], preferred_element_type=jnp.float32)
    acc = acc + jnp.dot(x1_ref[...], b1_ref[...], preferred_element_type=jnp.float32)
    o_ref[...] = acc


def vectorized_istft(stft_matrix, length, *, n_fft=16, win_length=16, hop_length=4,
                     center=True, normalized="energy", periodic_window=False,
                     force_pallas=False):
    B, C, F, K = stft_matrix.shape
    assert K == n_fft // 2 + 1
    BC = B * C
    hop = hop_length
    out_length = (F - 1) * hop + n_fft

    def finalize(out2d):
        out = out2d[:BC, :out_length]
        if center:
            p = n_fft // 2
            out = out[:, p:-p]
        out = out.reshape(B, C, -1).astype(jnp.float32)
        if out.shape[-1] != length:
            out = out[..., :length]
        return out

    # Interleaved (re, im) per (frame, bin) layout in a single fused pass
    # (XLA TPU has no complex bitcast); basis rows use the same ordering.
    x = jnp.stack([stft_matrix.real, stft_matrix.imag], axis=-1).astype(jnp.float32)
    x = x.reshape(BC, F, 2 * K)

    # ---- small-problem fast path: launch + per-step overhead dominates ----
    if not force_pallas and 2.0 * BC * (2 * F * K) * out_length < _SMALL_PROBLEM_FLOPS:
        dense = jnp.asarray(_make_dense_basis(n_fft, win_length, hop, normalized,
                                              F, out_length, periodic_window))
        return finalize(jnp.dot(x.reshape(BC, 2 * F * K), dense))

    # ---- time tile TN: multiple of 128 (lane-dense stores) and of hop ----
    base = 128 * hop // math.gcd(128, hop)
    tn = base
    while (_cdiv(n_fft, hop) - 1) > tn // hop:      # band must fit in 2 frame blocks
        tn += base

    def vmem_block_bytes(tn_, tb_):
        s_ = tn_ // hop
        fp_ = _round_up(2 * K, 128 // math.gcd(s_, 128))
        red_ = s_ * fp_
        return (2 * 2 * tb_ * red_ * 2      # two X operands, double-buffered, bf16
                + 2 * 2 * red_ * tn_ * 2    # two basis blocks, double-buffered, bf16
                + 2 * tb_ * tn_ * 4)        # output block, double-buffered, f32

    # Grow the time tile to amortize the ~0.35us/step overhead while keeping the
    # working set far below the v7x 64 MiB / v5e 16 MiB-scoped VMEM budgets.
    while out_length > 2 * tn and vmem_block_bytes(2 * tn, 256) < 12 * 1024 * 1024:
        tn *= 2

    S = tn // hop                                     # frames per frame block
    E = _cdiv(n_fft, hop) - 1                         # look-back frames per tile
    feat_pad = _round_up(2 * K, 128 // math.gcd(S, 128))
    red = S * feat_pad                                # contraction dim, multiple of 128
    n_tiles = _cdiv(out_length, tn)
    out_pad = n_tiles * tn
    f_blocks = n_tiles + 1
    f_padded = f_blocks * S
    assert F + E <= f_padded

    # Row tile: one 16-aligned block (bf16 sublane packing) of up to 256 rows;
    # never split small BC just to manufacture grid steps (single-TC v5e/v6e gain
    # nothing; v7x parallelism comes from the time-tile axis).
    if BC <= 256:
        tb = _round_up(BC, 16)
    else:
        n_row_tiles = _cdiv(BC, 256)
        tb = _round_up(_cdiv(BC, n_row_tiles), 16)
    bc_pad = _round_up(BC, tb)

    # One combined pad (rows, frame front/back, feature padding) + bf16 cast.
    x = x.astype(jnp.bfloat16)
    x = jnp.pad(x, ((0, bc_pad - BC), (E, f_padded - F - E), (0, feat_pad - 2 * K)))
    x = x.reshape(bc_pad, f_padded * feat_pad)

    b0_np, b1_np, _ = _make_banded_basis(n_fft, win_length, hop, normalized,
                                         periodic_window, S, feat_pad, tn)
    b0 = jnp.asarray(b0_np, dtype=jnp.bfloat16)
    b1 = jnp.asarray(b1_np, dtype=jnp.bfloat16)

    grid = (bc_pad // tb, n_tiles)
    vmem_bytes = vmem_block_bytes(tn, tb)
    vmem_limit = int(min(64 * 1024 * 1024, max(8 * 1024 * 1024, 1.25 * vmem_bytes)))
    cost = pl.CostEstimate(
        flops=int(2 * bc_pad * (2 * red) * out_pad),
        transcendentals=0,
        bytes_accessed=int(2 * x.size * 2 + (b0.size + b1.size) * 2
                           + bc_pad * out_pad * 4))

    out_full = pl.pallas_call(
        _banded_istft_kernel,
        out_shape=jax.ShapeDtypeStruct((bc_pad, out_pad), jnp.float32),
        grid=grid,
        in_specs=[
            pl.BlockSpec((tb, red), lambda i, j: (i, j)),       # padded frame block j
            pl.BlockSpec((tb, red), lambda i, j: (i, j + 1)),   # padded frame block j+1
            pl.BlockSpec((red, tn), lambda i, j: (0, 0)),       # banded basis 0 (resident)
            pl.BlockSpec((red, tn), lambda i, j: (0, 0)),       # banded basis 1 (resident)
        ],
        out_specs=pl.BlockSpec((tb, tn), lambda i, j: (i, j)),
        compiler_params=pltpu.CompilerParams(
            dimension_semantics=("parallel", "parallel"),
            vmem_limit_bytes=vmem_limit),
        cost_estimate=cost,
    )(x, x, b0, b1)

    return finalize(out_full)


def reference_istft(stft_matrix, length, *, n_fft, win_length, hop_length,
                    center, normalized, periodic_window=False):
    """Pure-JAX reference matching the torch forward semantics."""
    window = _hann_window(win_length, n_fft, periodic_window)
    norm = _istft_norm(window, hop_length, normalized)
    B, C, F, _ = stft_matrix.shape
    frames = jnp.fft.irfft(stft_matrix, n=n_fft, axis=-1)          # [B,C,F,n_fft]
    frames = frames * jnp.asarray(window.astype(np.float32))
    frames = frames.reshape(B * C, F, n_fft)
    out_length = (F - 1) * hop_length + n_fft
    out = jnp.zeros((B * C, out_length), jnp.float32)
    for f in range(F):
        s = f * hop_length
        out = out.at[:, s:s + n_fft].add(frames[:, f, :])
    if center:
        pad = n_fft // 2
        out = out[:, pad:-pad]
    out = out.reshape(B, C, -1) / norm
    if out.shape[-1] != length:
        out = out[..., :length]
    return out


if __name__ == "__main__":
    n_fft, hop = 16, 4
    K = n_fft // 2 + 1

    def make_input(B, C, F, key):
        kr, ki = jax.random.split(key)
        xr = jax.random.normal(kr, (B, C, F, K), jnp.float32)
        xi = jax.random.normal(ki, (B, C, F, K), jnp.float32)
        # valid rfft spectrum (real DC / Nyquist) so irfft semantics are unambiguous
        xi = xi.at[..., 0].set(0.0).at[..., -1].set(0.0)
        return xr + 1j * xi                      # complex64 [B, C, frames, bins]

    # --- Pallas (banded) path: multiple time tiles + cross-tile frame spill ---
    B, C, F = 2, 4, 64
    length = (F - 1) * hop
    stft = make_input(B, C, F, jax.random.PRNGKey(0))
    out = vectorized_istft(stft, length, n_fft=n_fft, win_length=n_fft,
                           hop_length=hop, center=True, normalized="energy",
                           force_pallas=True)
    out = jax.block_until_ready(out)
    ref = reference_istft(stft, length, n_fft=n_fft, win_length=n_fft,
                          hop_length=hop, center=True, normalized="energy")
    np.testing.assert_allclose(np.asarray(out), np.asarray(ref), rtol=2e-2, atol=2e-2)
    assert out.shape == (B, C, length)

    # --- tiny problem: exercises the small-problem XLA fast path ---
    B2, C2, F2 = 2, 2, 8
    length2 = (F2 - 1) * hop
    stft2 = make_input(B2, C2, F2, jax.random.PRNGKey(1))
    out2 = jax.block_until_ready(
        vectorized_istft(stft2, length2, n_fft=n_fft, win_length=n_fft,
                         hop_length=hop, center=True, normalized="energy"))
    ref2 = reference_istft(stft2, length2, n_fft=n_fft, win_length=n_fft,
                           hop_length=hop, center=True, normalized="energy")
    np.testing.assert_allclose(np.asarray(out2), np.asarray(ref2),
                               rtol=2e-2, atol=2e-2)
    assert out2.shape == (B2, C2, length2)

    print("KERNEL_OK")
</pallas_src>

<mosaic_0001>
module attributes {stable_mosaic.version = 11 : i64} {
  func.func @_banded_istft_kernel(%arg0: i32, %arg1: i32, %arg2: memref<16x1152xbf16, #tpu.memory_space<vmem>>, %arg3: memref<16x1152xbf16, #tpu.memory_space<vmem>>, %arg4: memref<1152x256xbf16, #tpu.memory_space<vmem>>, %arg5: memref<1152x256xbf16, #tpu.memory_space<vmem>>, %arg6: memref<16x256xf32, #tpu.memory_space<vmem>>) attributes {dimension_semantics = [#tpu.dimension_semantics<parallel>, #tpu.dimension_semantics<parallel>], iteration_bounds = array<i64: 1, 2>, scalar_prefetch = 0 : i64, scratch_operands = 0 : i64, tpu.core_type = #tpu.core_type<tc>, window_params = [{transform_indices = @transform_0, window_bounds = array<i64: 16, 1152>}, {transform_indices = @transform_1, window_bounds = array<i64: 16, 1152>}, {pipeline_mode = #tpu.pipeline_mode<synchronous>, transform_indices = @transform_2, window_bounds = array<i64: 1152, 256>}, {pipeline_mode = #tpu.pipeline_mode<synchronous>, transform_indices = @transform_3, window_bounds = array<i64: 1152, 256>}, {transform_indices = @transform_4, window_bounds = array<i64: 16, 256>}]} {
    %c0 = arith.constant 0 : index
    %c0_0 = arith.constant 0 : index
    %0 = vector.load %arg2[%c0, %c0_0] : memref<16x1152xbf16, #tpu.memory_space<vmem>>, vector<16x1152xbf16>
    %c0_1 = arith.constant 0 : index
    %c0_2 = arith.constant 0 : index
    %1 = vector.load %arg4[%c0_1, %c0_2] : memref<1152x256xbf16, #tpu.memory_space<vmem>>, vector<1152x256xbf16>
    %cst = arith.constant dense<0.000000e+00> : vector<16x256xf32>
    %2 = tpu.matmul %0, %1, %cst {dimension_numbers = #tpu.dot_dimension_numbers<[1], [0], [0], [1], [0, 0, 1, 1], [], []>} : vector<16x1152xbf16>, vector<1152x256xbf16>, vector<16x256xf32> -> vector<16x256xf32>
    %c0_3 = arith.constant 0 : index
    %c0_4 = arith.constant 0 : index
    %3 = vector.load %arg3[%c0_3, %c0_4] : memref<16x1152xbf16, #tpu.memory_space<vmem>>, vector<16x1152xbf16>
    %c0_5 = arith.constant 0 : index
    %c0_6 = arith.constant 0 : index
    %4 = vector.load %arg5[%c0_5, %c0_6] : memref<1152x256xbf16, #tpu.memory_space<vmem>>, vector<1152x256xbf16>
    %cst_7 = arith.constant dense<0.000000e+00> : vector<16x256xf32>
    %5 = tpu.matmul %3, %4, %cst_7 {dimension_numbers = #tpu.dot_dimension_numbers<[1], [0], [0], [1], [0, 0, 1, 1], [], []>} : vector<16x1152xbf16>, vector<1152x256xbf16>, vector<16x256xf32> -> vector<16x256xf32>
    %6 = arith.addf %2, %5 : vector<16x256xf32>
    %c0_8 = arith.constant 0 : index
    %c0_9 = arith.constant 0 : index
    %7 = vector.load %arg6[%c0_8, %c0_9] : memref<16x256xf32, #tpu.memory_space<vmem>>, vector<16x256xf32>
    tpu.vector_store %arg6[%c0_8, %c0_9], %6 {strides = array<i32>} : memref<16x256xf32, #tpu.memory_space<vmem>>, vector<16x256xf32>,
    return
  }
  func.func @transform_0(%arg0: i32, %arg1: i32) -> (i32, i32) {
    %c0_i32 = arith.constant 0 : i32
    return %arg0, %arg1 : i32, i32
  }
  func.func @transform_1(%arg0: i32, %arg1: i32) -> (i32, i32) {
    %c1_i32 = arith.constant 1 : i32
    %0 = arith.addi %arg1, %c1_i32 : i32
    %c0_i32 = arith.constant 0 : i32
    return %arg0, %0 : i32, i32
  }
  func.func @transform_2(%arg0: i32, %arg1: i32) -> (i32, i32) {
    %c0_i32 = arith.constant 0 : i32
    %c0_i32_0 = arith.constant 0 : i32
    %c0_i32_1 = arith.constant 0 : i32
    return %c0_i32, %c0_i32_0 : i32, i32
  }
  func.func @transform_3(%arg0: i32, %arg1: i32) -> (i32, i32) {
    %c0_i32 = arith.constant 0 : i32
    %c0_i32_0 = arith.constant 0 : i32
    %c0_i32_1 = arith.constant 0 : i32
    return %c0_i32, %c0_i32_0 : i32, i32
  }
  func.func @transform_4(%arg0: i32, %arg1: i32) -> (i32, i32) {
    %c0_i32 = arith.constant 0 : i32
    return %arg0, %arg1 : i32, i32
  }
}

</mosaic_0001>

<llo_original>
// kernel: tpu_custom_call.1
$region0: #{tpu_custom_call.1}
  #allocation0 [shape = 'u32[]', space=smem, size = 0x4, offset = 0x4, fixed_abs, tag = 'smem constant byte address 0x4 - core index']
  #allocation1 [shape = 'u32[72,128]{1,0:T(1,128)}', space=vmem, size = 0x9000, scoped, tag = 'internal scratch']
  %s0 = inlined_call_operand.hbm [shape: bf16[16,3456], index: 0, kind: input, shape index: {}]
  %s1 = inlined_call_operand.hbm [shape: bf16[16,3456], index: 1, kind: input, shape index: {}]
  %s2 = inlined_call_operand.hbm [shape: bf16[1152,256], index: 2, kind: input, shape index: {}]
  %s3 = inlined_call_operand.hbm [shape: bf16[1152,256], index: 3, kind: input, shape index: {}]
  %s4 = inlined_call_operand.hbm [shape: f32[16,512], index: 4, kind: output, shape index: {}]
  %s5 = sld [smem:[#allocation0]]
  $region65: #{tpu_custom_call.1} parent=0
    _
  %s7 = ssub.s32 1, %s5
  %s8 = scalar_select 0, %s7, %s5
  $region1: #{tpu_custom_call.1} parent=0
    #allocation2 [shape = 'u8[73728]{0}', space=vmem, size = 0x12000, scoped, tag = 'input window, operand 0']
    #allocation3 [shape = 's32[2]{0}', space=sflag, size = 0x8, scoped, tag = 'scoped memory for tpu_custom_call.1']
    #allocation4 [shape = 's32[2]{0}', space=sflag, size = 0x8, scoped, tag = 'scoped memory for tpu_custom_call.1']
    #allocation5 [shape = 'u8[73728]{0}', space=vmem, size = 0x12000, scoped, tag = 'input window, operand 1']
    #allocation6 [shape = 's32[2]{0}', space=sflag, size = 0x8, scoped, tag = 'scoped memory for tpu_custom_call.1']
    #allocation7 [shape = 'u8[589824]{0}', space=vmem, size = 0x90000, scoped, tag = 'input window, operand 2, single buffered']
    #allocation8 [shape = 'u8[589824]{0}', space=vmem, size = 0x90000, scoped, tag = 'input window, operand 3, single buffered']
    #allocation9 [shape = 's32[1]{0}', space=sflag, size = 0x4, scoped, tag = 'scoped memory for tpu_custom_call.1']
    #allocation10 [shape = 'u8[32768]{0}', space=vmem, size = 0x8000, scoped, tag = 'output window, operand 0']
    %9 = vsyncpa [#allocation3], 0
    %s10 = scalar_lea.sflag [#allocation3], 1
    %11 = vsyncpa %s10, 0
    %12 = vsyncpa [#allocation6], 0
    %s13 = scalar_lea.sflag [#allocation6], 1
    %14 = vsyncpa %s13, 0
    %15 = vsyncpa [#allocation9], 0
    %16 = vsyncpa [#allocation4], 0
    %s17 = scalar_lea.sflag [#allocation4], 1
    %18 = vsyncpa %s17, 0
    loop: start=0, step=1, limit=4
    $region2: #{tpu_custom_call.1} parent=1 // loop_pre_header
      _
    $region3: #{tpu_custom_call.1} parent=1 // loop_header
      %s20 = sphi 0, %s24
      %p21 = scmp.ge.s32.totalorder %s20, 4
      %s27 = sphi 0, %s39
      %s28 = sphi 0, %s35
      %s29 = sphi 0, %s27
      %s30 = sphi 0, %s28
      %s31 = sphi 0, %s29
      %s32 = sphi 0, %s30
      %s44 = sphi 0, %s46
      %s47 = sphi 0, %s44
      %s48 = sphi 0, %s47
      %s64 = sphi 0, %s48
      %s74 = sphi 0, %s76
      %s77 = sphi 0, %s74
      %s78 = sphi 0, %s77
      %s94 = sphi 0, %s78
      %s98 = sphi 0, %s98
      %s100 = sphi 0, %s98
      %s101 = sphi 0, %s100
      %s115 = sphi 0, %s101
      %s119 = sphi 0, %s119
      %s121 = sphi 0, %s119
      %s122 = sphi 0, %s121
      %s136 = sphi 0, %s122
      %s144 = sphi 0, %s146
      %s147 = sphi 0, %s144
      %s148 = sphi 0, %s147
      %s164 = sphi 0, %s148
    $region4: #{tpu_custom_call.1} parent=1 // loop_header_branch
      %23 = sbr.rel (%p21) target = $region8
    $region5: #{tpu_custom_call.1} parent=1 // loop_body
      %s25 = ssub.s32 %s20, 1
      %s26 = ssub.s32 %s20, 2
      %s33 = sadd.s32 1, %s28
      %p34 = scmp.ge.s32.totalorder %s33, 2
      %s35 = scalar_select %p34, 0, %s33
      %s36 = sadd.s32 1, %s27
      %s37 = scalar_select %p34, %s36, %s27
      %p38 = scmp.ge.s32.totalorder %s37, 1
      %s39 = scalar_select %p38, 0, %s37
      %s40 = ssub.s32 %s27, %s39
      %s41 = ssub.s32 %s28, %s35
      %s42 = sor.u32 %s40, %s41
      %p43 = scmp.eq.s32.totalorder %s42, 0
      %s45 = sadd.s32 %s44, 1
      %s46 = scalar_select %p43, %s44, %s45
      %p49 = pneg %p43
      %p50 = scmp.eq.s32.totalorder %s20, 1
      %p51 = por %p49, %p50
      %p52 = scmp.ne.s32.totalorder %s44, %s47
      %p53 = scmp.eq.s32.totalorder %s20, 0
      %p54 = por %p52, %p53
      %p55 = scmp.ne.s32.totalorder %s44, %s47
      %p56 = scmp.eq.s32.totalorder %s25, 1
      %p57 = por %p55, %p56
      %p58 = scmp.ne.s32.totalorder %s47, %s48
      %p59 = scmp.eq.s32.totalorder %s25, 0
      %p60 = por %p58, %p59
      %p61 = scmp.ne.s32.totalorder %s47, %s48
      %p62 = scmp.eq.s32.totalorder %s26, 1
      %p63 = por %p61, %p62
      %p65 = scmp.ne.s32.totalorder %s48, %s64
      %p66 = scmp.eq.s32.totalorder %s26, 0
      %p67 = por %p65, %p66
      %s68 = sadd.s32 %s28, 1
      %s69 = sadd.s32 %s35, 1
      %s70 = ssub.s32 %s27, %s39
      %s71 = ssub.s32 %s68, %s69
      %s72 = sor.u32 %s70, %s71
      %p73 = scmp.eq.s32.totalorder %s72, 0
      %s75 = sadd.s32 %s74, 1
      %s76 = scalar_select %p73, %s74, %s75
      %p79 = pneg %p73
      %p80 = scmp.eq.s32.totalorder %s20, 1
      %p81 = por %p79, %p80
      %p82 = scmp.ne.s32.totalorder %s74, %s77
      %p83 = scmp.eq.s32.totalorder %s20, 0
      %p84 = por %p82, %p83
      %p85 = scmp.ne.s32.totalorder %s74, %s77
      %p86 = scmp.eq.s32.totalorder %s25, 1
      %p87 = por %p85, %p86
      %p88 = scmp.ne.s32.totalorder %s77, %s78
      %p89 = scmp.eq.s32.totalorder %s25, 0
      %p90 = por %p88, %p89
      %p91 = scmp.ne.s32.totalorder %s77, %s78
      %p92 = scmp.eq.s32.totalorder %s26, 1
      %p93 = por %p91, %p92
      %p95 = scmp.ne.s32.totalorder %s78, %s94
      %p96 = scmp.eq.s32.totalorder %s26, 0
      %p97 = por %p95, %p96
      %s99 = sadd.s32 %s98, 1
      %p102 = scmp.eq.s32.totalorder %s20, 1
      %p103 = scmp.ne.s32.totalorder %s98, %s100
      %p104 = scmp.eq.s32.totalorder %s20, 0
      %p105 = por %p103, %p104
      %p106 = scmp.ne.s32.totalorder %s98, %s100
      %p107 = scmp.eq.s32.totalorder %s25, 1
      %p108 = por %p106, %p107
      %p109 = scmp.ne.s32.totalorder %s100, %s101
      %p110 = scmp.eq.s32.totalorder %s25, 0
      %p111 = por %p109, %p110
      %p112 = scmp.ne.s32.totalorder %s100, %s101
      %p113 = scmp.eq.s32.totalorder %s26, 1
      %p114 = por %p112, %p113
      %p116 = scmp.ne.s32.totalorder %s101, %s115
      %p117 = scmp.eq.s32.totalorder %s26, 0
      %p118 = por %p116, %p117
      %s120 = sadd.s32 %s119, 1
      %p123 = scmp.eq.s32.totalorder %s20, 1
      %p124 = scmp.ne.s32.totalorder %s119, %s121
      %p125 = scmp.eq.s32.totalorder %s20, 0
      %p126 = por %p124, %p125
      %p127 = scmp.ne.s32.totalorder %s119, %s121
      %p128 = scmp.eq.s32.totalorder %s25, 1
      %p129 = por %p127, %p128
      %p130 = scmp.ne.s32.totalorder %s121, %s122
      %p131 = scmp.eq.s32.totalorder %s25, 0
      %p132 = por %p130, %p131
      %p133 = scmp.ne.s32.totalorder %s121, %s122
      %p134 = scmp.eq.s32.totalorder %s26, 1
      %p135 = por %p133, %p134
      %p137 = scmp.ne.s32.totalorder %s122, %s136
      %p138 = scmp.eq.s32.totalorder %s26, 0
      %p139 = por %p137, %p138
      %s140 = ssub.s32 %s27, %s39
      %s141 = ssub.s32 %s28, %s35
      %s142 = sor.u32 %s140, %s141
      %p143 = scmp.eq.s32.totalorder %s142, 0
      %s145 = sadd.s32 %s144, 1
      %s146 = scalar_select %p143, %s144, %s145
      %p149 = pneg %p143
      %p150 = scmp.eq.s32.totalorder %s20, 1
      %p151 = por %p149, %p150
      %p152 = scmp.ne.s32.totalorder %s144, %s147
      %p153 = scmp.eq.s32.totalorder %s20, 0
      %p154 = por %p152, %p153
      %p155 = scmp.ne.s32.totalorder %s144, %s147
      %p156 = scmp.eq.s32.totalorder %s25, 1
      %p157 = por %p155, %p156
      %p158 = scmp.ne.s32.totalorder %s147, %s148
      %p159 = scmp.eq.s32.totalorder %s25, 0
      %p160 = por %p158, %p159
      %p161 = scmp.ne.s32.totalorder %s147, %s148
      %p162 = scmp.eq.s32.totalorder %s26, 1
      %p163 = por %p161, %p162
      %p165 = scmp.ne.s32.totalorder %s148, %s164
      %p166 = scmp.eq.s32.totalorder %s26, 0
      %p167 = por %p165, %p166
      %p168 = scmp.le.s32.totalorder 1, %s20
      %p169 = scmp.lt.s32.totalorder %s20, 3
      %p170 = pnand %p168, %p169
      %p171 = pneg %p170
      // Predicated region
      $region9: #{tpu_custom_call.1} parent=5 // pred_check
        _
      $region10: #{tpu_custom_call.1} parent=5 // pred_check_branch
        %173 = sbr.rel (%p170) target = $region12
      $region11: #{tpu_custom_call.1} parent=5 // pred_region
        %s174 = ssub.s32 %s20, 1
        // Predicated region
        $region13: #{tpu_custom_call.1} parent=11 // pred_check
          %p175 = pneg %p111
        $region14: #{tpu_custom_call.1} parent=11 // pred_check_branch
          %177 = sbr.rel (%p175) target = $region16
        $region15: #{tpu_custom_call.1} parent=11 // pred_region
          %179 = vsyncadd [#allocation6], 0
          %s180 = sshll.u32 %s2, 4
          %s181 = int_to_ptr.hbm [resolvable:$true] %s180
          %s182 = sshll.u32 [#allocation7], 4
          %s183 = int_to_ptr.vmem [resolvable:$true] %s182
          %188 = dma.hbm_to_vmem [thread:$0]  %s181, 18432, %s183, [#allocation6], 128, 128, 8
        $region16: #{tpu_custom_call.1} parent=11 // pred_fallthru
          _
        // Predicated region
        $region17: #{tpu_custom_call.1} parent=11 // pred_check
          %p189 = pneg %p132
        $region18: #{tpu_custom_call.1} parent=11 // pred_check_branch
          %191 = sbr.rel (%p189) target = $region20
        $region19: #{tpu_custom_call.1} parent=11 // pred_region
          %193 = vsyncadd [#allocation9], 0
          %s194 = sshll.u32 %s3, 4
          %s195 = int_to_ptr.hbm [resolvable:$true] %s194
          %s196 = sshll.u32 [#allocation8], 4
          %s197 = int_to_ptr.vmem [resolvable:$true] %s196
          %202 = dma.hbm_to_vmem [thread:$0]  %s195, 18432, %s197, [#allocation9], 128, 128, 8
        $region20: #{tpu_custom_call.1} parent=11 // pred_fallthru
          _
      $region12: #{tpu_custom_call.1} parent=5 // pred_fallthru
        _
      %p203 = scmp.lt.s32.totalorder %s20, 2
      // Predicated region
      $region21: #{tpu_custom_call.1} parent=5 // pred_check
        %p204 = pneg %p203
      $region22: #{tpu_custom_call.1} parent=5 // pred_check_branch
        %206 = sbr.rel (%p204) target = $region24
      $region23: #{tpu_custom_call.1} parent=5 // pred_region
        // Predicated region
        $region25: #{tpu_custom_call.1} parent=23 // pred_check
          %p207 = pneg %p54
        $region26: #{tpu_custom_call.1} parent=23 // pred_check_branch
          %209 = sbr.rel (%p207) target = $region28
        $region27: #{tpu_custom_call.1} parent=23 // pred_region
          %s210 = sand.u32 %s44, 1
          %s211 = scalar_lea.sflag [#allocation3], %s210
          %s212 = sand.u32 %s44, 1
          %s213 = smul.addr %s212, 72
          %s214 = scalar_lea.vmem [#allocation2], %s213
          %s215 = smul.u32 2, %s27
          %s216 = smul.u32 9, %s28
          %218 = vsyncadd %s211, 0
          %s219 = smul.addr %s215, 27
          %s220 = sadd.s32 %s216, %s219
          %s221 = smul.addr %s220, 4
          %s222 = scalar_lea.hbm %s0, %s221
          %s223 = sshll.u32 %s222, 4
          %s224 = int_to_ptr.hbm [resolvable:$true] %s223
          %s225 = sshll.u32 %s214, 4
          %s226 = int_to_ptr.vmem [resolvable:$true] %s225
          %231 = dma.hbm_to_vmem [thread:$0]  %s224, 1152, %s226, %s211, 1728, 576, 36
        $region28: #{tpu_custom_call.1} parent=23 // pred_fallthru
          _
        // Predicated region
        $region29: #{tpu_custom_call.1} parent=23 // pred_check
          %p232 = pneg %p84
        $region30: #{tpu_custom_call.1} parent=23 // pred_check_branch
          %234 = sbr.rel (%p232) target = $region32
        $region31: #{tpu_custom_call.1} parent=23 // pred_region
          %s235 = sand.u32 %s20, 1
          %s236 = scalar_lea.sflag [#allocation6], %s235
          %s237 = sand.u32 %s74, 1
          %s238 = smul.addr %s237, 72
          %s239 = scalar_lea.vmem [#allocation5], %s238
          %s240 = sadd.s32 %s28, 1
          %s241 = smul.u32 2, %s27
          %s242 = smul.u32 9, %s240
          %244 = vsyncadd %s236, 0
          %s245 = smul.addr %s241, 27
          %s246 = sadd.s32 %s242, %s245
          %s247 = smul.addr %s246, 4
          %s248 = scalar_lea.hbm %s1, %s247
          %s249 = sshll.u32 %s248, 4
          %s250 = int_to_ptr.hbm [resolvable:$true] %s249
          %s251 = sshll.u32 %s239, 4
          %s252 = int_to_ptr.vmem [resolvable:$true] %s251
          %257 = dma.hbm_to_vmem [thread:$0]  %s250, 1152, %s252, %s236, 1728, 576, 36
        $region32: #{tpu_custom_call.1} parent=23 // pred_fallthru
          _
      $region24: #{tpu_custom_call.1} parent=5 // pred_fallthru
        _
      %p258 = scmp.le.s32.totalorder 1, %s20
      %p259 = scmp.lt.s32.totalorder %s20, 3
      %p260 = pnand %p258, %p259
      %p261 = pneg %p260
      // Predicated region
      $region33: #{tpu_custom_call.1} parent=5 // pred_check
        _
      $region34: #{tpu_custom_call.1} parent=5 // pred_check_branch
        %263 = sbr.rel (%p260) target = $region36
      $region35: #{tpu_custom_call.1} parent=5 // pred_region
        %s264 = ssub.s32 %s20, 1
        %s265 = sand.u32 %s47, 1
        %s266 = scalar_lea.sflag [#allocation3], %s265
        %s267 = sand.u32 %s47, 1
        %s268 = smul.addr %s267, 72
        %s269 = scalar_lea.vmem [#allocation2], %s268
        // Predicated region
        $region37: #{tpu_custom_call.1} parent=35 // pred_check
          %p270 = pneg %p60
        $region38: #{tpu_custom_call.1} parent=35 // pred_check_branch
          %272 = sbr.rel (%p270) target = $region40
        $region39: #{tpu_custom_call.1} parent=35 // pred_region
          %274 = dma.done %s266, 1152
        $region40: #{tpu_custom_call.1} parent=35 // pred_fallthru
          _
        %s275 = sand.u32 %s25, 1
        %s276 = scalar_lea.sflag [#allocation6], %s275
        %s277 = sand.u32 %s77, 1
        %s278 = smul.addr %s277, 72
        %s279 = scalar_lea.vmem [#allocation5], %s278
        // Predicated region
        $region41: #{tpu_custom_call.1} parent=35 // pred_check
          %p280 = pneg %p90
        $region42: #{tpu_custom_call.1} parent=35 // pred_check_branch
          %282 = sbr.rel (%p280) target = $region44
        $region43: #{tpu_custom_call.1} parent=35 // pred_region
          %284 = dma.done %s276, 1152
        $region44: #{tpu_custom_call.1} parent=35 // pred_fallthru
          _
        // Predicated region
        $region45: #{tpu_custom_call.1} parent=35 // pred_check
          %p285 = pneg %p111
        $region46: #{tpu_custom_call.1} parent=35 // pred_check_branch
          %287 = sbr.rel (%p285) target = $region48
        $region47: #{tpu_custom_call.1} parent=35 // pred_region
          %289 = dma.done [#allocation6], 18432
        $region48: #{tpu_custom_call.1} parent=35 // pred_fallthru
          _
        // Predicated region
        $region49: #{tpu_custom_call.1} parent=35 // pred_check
          %p290 = pneg %p132
        $region50: #{tpu_custom_call.1} parent=35 // pred_check_branch
          %292 = sbr.rel (%p290) target = $region52
        $region51: #{tpu_custom_call.1} parent=35 // pred_region
          %294 = dma.done [#allocation9], 18432
        $region52: #{tpu_custom_call.1} parent=35 // pred_fallthru
          _
        %s295 = sand.u32 %s47, 1
        %s296 = scalar_lea.sflag [#allocation3], %s295
        %s297 = sand.u32 %s47, 1
        %s298 = smul.addr %s297, 72
        %s299 = scalar_lea.vmem [#allocation2], %s298
        %p300 = pneg %p60
        %p301 = pneg %p57
        %s302 = sand.u32 %s25, 1
        %s303 = scalar_lea.sflag [#allocation6], %s302
        %s304 = sand.u32 %s77, 1
        %s305 = smul.addr %s304, 72
        %s306 = scalar_lea.vmem [#allocation5], %s305
        %p307 = pneg %p90
        %p308 = pneg %p87
        %p309 = pneg %p111
        %p310 = pneg %p108
        %p311 = pneg %p132
        %p312 = pneg %p129
        %p313 = pneg %p160
        %p314 = pneg %p157
        %s315 = sand.u32 %s147, 1
        %s316 = scalar_lea.sflag [#allocation4], %s315
        %s317 = sand.u32 %s147, 1
        %s318 = smul.addr %s317, 32
        %s319 = scalar_lea.vmem [#allocation10], %s318
        %s320 = smul.u32 2, %s29
        %s321 = smul.u32 9, %s30
        %s322 = sadd.s32 %s30, 1
        %s323 = smul.u32 2, %s29
        %s324 = smul.u32 9, %s322
        %s325 = smul.u32 2, %s29
        %s326 = smul.u32 2, %s30
        %v327 = vld [vmem:[%s269] sm:$0xff]
        %v328 = vld [vmem:[%s269 + $0x8] sm:$0xff]
        %v329 = vld [vmem:[%s269 + $0x10] sm:$0xff]
        %v330 = vld [vmem:[%s269 + $0x18] sm:$0xff]
        %v331 = vld [vmem:[%s269 + $0x20] sm:$0xf]
        %v332 = vld [vmem:[%s269 + $0x24] sm:$0xff]
        %v333 = vld [vmem:[%s269 + $0x2c] sm:$0xff]
        %v334 = vld [vmem:[%s269 + $0x34] sm:$0xff]
        %v335 = vld [vmem:[%s269 + $0x3c] sm:$0xff]
        %v336 = vld [vmem:[%s269 + $0x44] sm:$0xf]
        %v337 = vld [vmem:[#allocation7] sm:$0xff]
        %v338 = vld [vmem:[#allocation7 + $0x8] sm:$0xff]
        %v339 = vld [vmem:[#allocation7 + $0x10] sm:$0xff]
        %v340 = vld [vmem:[#allocation7 + $0x18] sm:$0xff]
        %v341 = vld [vmem:[#allocation7 + $0x20] sm:$0xff]
        %v342 = vld [vmem:[#allocation7 + $0x28] sm:$0xff]
        %v343 = vld [vmem:[#allocation7 + $0x30] sm:$0xff]
        %v344 = vld [vmem:[#allocation7 + $0x38] sm:$0xff]
        %v345 = vld [vmem:[#allocation7 + $0x40] sm:$0xff]
        %v346 = vld [vmem:[#allocation7 + $0x48] sm:$0xff]
        %v347 = vld [vmem:[#allocation7 + $0x50] sm:$0xff]
        %v348 = vld [vmem:[#allocation7 + $0x58] sm:$0xff]
        %v349 = vld [vmem:[#allocation7 + $0x60] sm:$0xff]
        %v350 = vld [vmem:[#allocation7 + $0x68] sm:$0xff]
        %v351 = vld [vmem:[#allocation7 + $0x70] sm:$0xff]
        %v352 = vld [vmem:[#allocation7 + $0x78] sm:$0xff]
        %v353 = vld [vmem:[#allocation7 + $0x80] sm:$0xff]
        %v354 = vld [vmem:[#allocation7 + $0x88] sm:$0xff]
        %v355 = vld [vmem:[#allocation7 + $0x90] sm:$0xff]
        %v356 = vld [vmem:[#allocation7 + $0x98] sm:$0xff]
        %v357 = vld [vmem:[#allocation7 + $0xa0] sm:$0xff]
        %v358 = vld [vmem:[#allocation7 + $0xa8] sm:$0xff]
        %v359 = vld [vmem:[#allocation7 + $0xb0] sm:$0xff]
        %v360 = vld [vmem:[#allocation7 + $0xb8] sm:$0xff]
        %v361 = vld [vmem:[#allocation7 + $0xc0] sm:$0xff]
        %v362 = vld [vmem:[#allocation7 + $0xc8] sm:$0xff]
        %v363 = vld [vmem:[#allocation7 + $0xd0] sm:$0xff]
        %v364 = vld [vmem:[#allocation7 + $0xd8] sm:$0xff]
        %v365 = vld [vmem:[#allocation7 + $0xe0] sm:$0xff]
        %v366 = vld [vmem:[#allocation7 + $0xe8] sm:$0xff]
        %v367 = vld [vmem:[#allocation7 + $0xf0] sm:$0xff]
        %v368 = vld [vmem:[#allocation7 + $0xf8] sm:$0xff]
        %v369 = vld [vmem:[#allocation7 + $0x100] sm:$0xff]
        %v370 = vld [vmem:[#allocation7 + $0x108] sm:$0xff]
        %v371 = vld [vmem:[#allocation7 + $0x110] sm:$0xff]
        %v372 = vld [vmem:[#allocation7 + $0x118] sm:$0xff]
        %v373 = vld [vmem:[#allocation7 + $0x120] sm:$0xff]
        %v374 = vld [vmem:[#allocation7 + $0x128] sm:$0xff]
        %v375 = vld [vmem:[#allocation7 + $0x130] sm:$0xff]
        %v376 = vld [vmem:[#allocation7 + $0x138] sm:$0xff]
        %v377 = vld [vmem:[#allocation7 + $0x140] sm:$0xff]
        %v378 = vld [vmem:[#allocation7 + $0x148] sm:$0xff]
        %v379 = vld [vmem:[#allocation7 + $0x150] sm:$0xff]
        %v380 = vld [vmem:[#allocation7 + $0x158] sm:$0xff]
        %v381 = vld [vmem:[#allocation7 + $0x160] sm:$0xff]
        %v382 = vld [vmem:[#allocation7 + $0x168] sm:$0xff]
        %v383 = vld [vmem:[#allocation7 + $0x170] sm:$0xff]
        %v384 = vld [vmem:[#allocation7 + $0x178] sm:$0xff]
        %v385 = vld [vmem:[#allocation7 + $0x180] sm:$0xff]
        %v386 = vld [vmem:[#allocation7 + $0x188] sm:$0xff]
        %v387 = vld [vmem:[#allocation7 + $0x190] sm:$0xff]
        %v388 = vld [vmem:[#allocation7 + $0x198] sm:$0xff]
        %v389 = vld [vmem:[#allocation7 + $0x1a0] sm:$0xff]
        %v390 = vld [vmem:[#allocation7 + $0x1a8] sm:$0xff]
        %v391 = vld [vmem:[#allocation7 + $0x1b0] sm:$0xff]
        %v392 = vld [vmem:[#allocation7 + $0x1b8] sm:$0xff]
        %v393 = vld [vmem:[#allocation7 + $0x1c0] sm:$0xff]
        %v394 = vld [vmem:[#allocation7 + $0x1c8] sm:$0xff]
        %v395 = vld [vmem:[#allocation7 + $0x1d0] sm:$0xff]
        %v396 = vld [vmem:[#allocation7 + $0x1d8] sm:$0xff]
        %v397 = vld [vmem:[#allocation7 + $0x1e0] sm:$0xff]
        %v398 = vld [vmem:[#allocation7 + $0x1e8] sm:$0xff]
        %v399 = vld [vmem:[#allocation7 + $0x1f0] sm:$0xff]
        %v400 = vld [vmem:[#allocation7 + $0x1f8] sm:$0xff]
        %v401 = vld [vmem:[#allocation7 + $0x200] sm:$0xff]
        %v402 = vld [vmem:[#allocation7 + $0x208] sm:$0xff]
        %v403 = vld [vmem:[#allocation7 + $0x210] sm:$0xff]
        %v404 = vld [vmem:[#allocation7 + $0x218] sm:$0xff]
        %v405 = vld [vmem:[#allocation7 + $0x220] sm:$0xff]
        %v406 = vld [vmem:[#allocation7 + $0x228] sm:$0xff]
        %v407 = vld [vmem:[#allocation7 + $0x230] sm:$0xff]
        %v408 = vld [vmem:[#allocation7 + $0x238] sm:$0xff]
        %v409 = vld [vmem:[#allocation7 + $0x240] sm:$0xff]
        %v410 = vld [vmem:[#allocation7 + $0x248] sm:$0xff]
        %v411 = vld [vmem:[#allocation7 + $0x250] sm:$0xff]
        %v412 = vld [vmem:[#allocation7 + $0x258] sm:$0xff]
        %v413 = vld [vmem:[#allocation7 + $0x260] sm:$0xff]
        %v414 = vld [vmem:[#allocation7 + $0x268] sm:$0xff]
        %v415 = vld [vmem:[#allocation7 + $0x270] sm:$0xff]
        %v416 = vld [vmem:[#allocation7 + $0x278] sm:$0xff]
        %v417 = vld [vmem:[#allocation7 + $0x280] sm:$0xff]
        %v418 = vld [vmem:[#allocation7 + $0x288] sm:$0xff]
        %v419 = vld [vmem:[#allocation7 + $0x290] sm:$0xff]
        %v420 = vld [vmem:[#allocation7 + $0x298] sm:$0xff]
        %v421 = vld [vmem:[#allocation7 + $0x2a0] sm:$0xff]
        %v422 = vld [vmem:[#allocation7 + $0x2a8] sm:$0xff]
        %v423 = vld [vmem:[#allocation7 + $0x2b0] sm:$0xff]
        %v424 = vld [vmem:[#allocation7 + $0x2b8] sm:$0xff]
        %v425 = vld [vmem:[#allocation7 + $0x2c0] sm:$0xff]
        %v426 = vld [vmem:[#allocation7 + $0x2c8] sm:$0xff]
        %v427 = vld [vmem:[#allocation7 + $0x2d0] sm:$0xff]
        %v428 = vld [vmem:[#allocation7 + $0x2d8] sm:$0xff]
        %v429 = vld [vmem:[#allocation7 + $0x2e0] sm:$0xff]
        %v430 = vld [vmem:[#allocation7 + $0x2e8] sm:$0xff]
        %v431 = vld [vmem:[#allocation7 + $0x2f0] sm:$0xff]
        %v432 = vld [vmem:[#allocation7 + $0x2f8] sm:$0xff]
        %v433 = vld [vmem:[#allocation7 + $0x300] sm:$0xff]
        %v434 = vld [vmem:[#allocation7 + $0x308] sm:$0xff]
        %v435 = vld [vmem:[#allocation7 + $0x310] sm:$0xff]
        %v436 = vld [vmem:[#allocation7 + $0x318] sm:$0xff]
        %v437 = vld [vmem:[#allocation7 + $0x320] sm:$0xff]
        %v438 = vld [vmem:[#allocation7 + $0x328] sm:$0xff]
        %v439 = vld [vmem:[#allocation7 + $0x330] sm:$0xff]
        %v440 = vld [vmem:[#allocation7 + $0x338] sm:$0xff]
        %v441 = vld [vmem:[#allocation7 + $0x340] sm:$0xff]
        %v442 = vld [vmem:[#allocation7 + $0x348] sm:$0xff]
        %v443 = vld [vmem:[#allocation7 + $0x350] sm:$0xff]
        %v444 = vld [vmem:[#allocation7 + $0x358] sm:$0xff]
        %v445 = vld [vmem:[#allocation7 + $0x360] sm:$0xff]
        %v446 = vld [vmem:[#allocation7 + $0x368] sm:$0xff]
        %v447 = vld [vmem:[#allocation7 + $0x370] sm:$0xff]
        %v448 = vld [vmem:[#allocation7 + $0x378] sm:$0xff]
        %v449 = vld [vmem:[#allocation7 + $0x380] sm:$0xff]
        %v450 = vld [vmem:[#allocation7 + $0x388] sm:$0xff]
        %v451 = vld [vmem:[#allocation7 + $0x390] sm:$0xff]
        %v452 = vld [vmem:[#allocation7 + $0x398] sm:$0xff]
        %v453 = vld [vmem:[#allocation7 + $0x3a0] sm:$0xff]
        %v454 = vld [vmem:[#allocation7 + $0x3a8] sm:$0xff]
        %v455 = vld [vmem:[#allocation7 + $0x3b0] sm:$0xff]
        %v456 = vld [vmem:[#allocation7 + $0x3b8] sm:$0xff]
        %v457 = vld [vmem:[#allocation7 + $0x3c0] sm:$0xff]
        %v458 = vld [vmem:[#allocation7 + $0x3c8] sm:$0xff]
        %v459 = vld [vmem:[#allocation7 + $0x3d0] sm:$0xff]
        %v460 = vld [vmem:[#allocation7 + $0x3d8] sm:$0xff]
        %v461 = vld [vmem:[#allocation7 + $0x3e0] sm:$0xff]
        %v462 = vld [vmem:[#allocation7 + $0x3e8] sm:$0xff]
        %v463 = vld [vmem:[#allocation7 + $0x3f0] sm:$0xff]
        %v464 = vld [vmem:[#allocation7 + $0x3f8] sm:$0xff]
        %v465 = vld [vmem:[#allocation7 + $0x400] sm:$0xff]
        %v466 = vld [vmem:[#allocation7 + $0x408] sm:$0xff]
        %v467 = vld [vmem:[#allocation7 + $0x410] sm:$0xff]
        %v468 = vld [vmem:[#allocation7 + $0x418] sm:$0xff]
        %v469 = vld [vmem:[#allocation7 + $0x420] sm:$0xff]
        %v470 = vld [vmem:[#allocation7 + $0x428] sm:$0xff]
        %v471 = vld [vmem:[#allocation7 + $0x430] sm:$0xff]
        %v472 = vld [vmem:[#allocation7 + $0x438] sm:$0xff]
        %v473 = vld [vmem:[#allocation7 + $0x440] sm:$0xff]
        %v474 = vld [vmem:[#allocation7 + $0x448] sm:$0xff]
        %v475 = vld [vmem:[#allocation7 + $0x450] sm:$0xff]
        %v476 = vld [vmem:[#allocation7 + $0x458] sm:$0xff]
        %v477 = vld [vmem:[#allocation7 + $0x460] sm:$0xff]
        %v478 = vld [vmem:[#allocation7 + $0x468] sm:$0xff]
        %v479 = vld [vmem:[#allocation7 + $0x470] sm:$0xff]
        %v480 = vld [vmem:[#allocation7 + $0x478] sm:$0xff]
        %v481 = vld [vmem:[%s279] sm:$0xff]
        %v482 = vld [vmem:[%s279 + $0x8] sm:$0xff]
        %v483 = vld [vmem:[%s279 + $0x10] sm:$0xff]
        %v484 = vld [vmem:[%s279 + $0x18] sm:$0xff]
        %v485 = vld [vmem:[%s279 + $0x20] sm:$0xf]
        %v486 = vld [vmem:[%s279 + $0x24] sm:$0xff]
        %v487 = vld [vmem:[%s279 + $0x2c] sm:$0xff]
        %v488 = vld [vmem:[%s279 + $0x34] sm:$0xff]
        %v489 = vld [vmem:[%s279 + $0x3c] sm:$0xff]
        %v490 = vld [vmem:[%s279 + $0x44] sm:$0xf]
        %v491 = vld [vmem:[#allocation8] sm:$0xff]
        %v492 = vld [vmem:[#allocation8 + $0x8] sm:$0xff]
        %v493 = vld [vmem:[#allocation8 + $0x10] sm:$0xff]
        %v494 = vld [vmem:[#allocation8 + $0x18] sm:$0xff]
        %v495 = vld [vmem:[#allocation8 + $0x20] sm:$0xff]
        %v496 = vld [vmem:[#allocation8 + $0x28] sm:$0xff]
        %v497 = vld [vmem:[#allocation8 + $0x30] sm:$0xff]
        %v498 = vld [vmem:[#allocation8 + $0x38] sm:$0xff]
        %v499 = vld [vmem:[#allocation8 + $0x40] sm:$0xff]
        %v500 = vld [vmem:[#allocation8 + $0x48] sm:$0xff]
        %v501 = vld [vmem:[#allocation8 + $0x50] sm:$0xff]
        %v502 = vld [vmem:[#allocation8 + $0x58] sm:$0xff]
        %v503 = vld [vmem:[#allocation8 + $0x60] sm:$0xff]
        %v504 = vld [vmem:[#allocation8 + $0x68] sm:$0xff]
        %v505 = vld [vmem:[#allocation8 + $0x70] sm:$0xff]
        %v506 = vld [vmem:[#allocation8 + $0x78] sm:$0xff]
        %v507 = vld [vmem:[#allocation8 + $0x80] sm:$0xff]
        %v508 = vld [vmem:[#allocation8 + $0x88] sm:$0xff]
        %v509 = vld [vmem:[#allocation8 + $0x90] sm:$0xff]
        %v510 = vld [vmem:[#allocation8 + $0x98] sm:$0xff]
        %v511 = vld [vmem:[#allocation8 + $0xa0] sm:$0xff]
        %v512 = vld [vmem:[#allocation8 + $0xa8] sm:$0xff]
        %v513 = vld [vmem:[#allocation8 + $0xb0] sm:$0xff]
        %v514 = vld [vmem:[#allocation8 + $0xb8] sm:$0xff]
        %v515 = vld [vmem:[#allocation8 + $0xc0] sm:$0xff]
        %v516 = vld [vmem:[#allocation8 + $0xc8] sm:$0xff]
        %v517 = vld [vmem:[#allocation8 + $0xd0] sm:$0xff]
        %v518 = vld [vmem:[#allocation8 + $0xd8] sm:$0xff]
        %v519 = vld [vmem:[#allocation8 + $0xe0] sm:$0xff]
        %v520 = vld [vmem:[#allocation8 + $0xe8] sm:$0xff]
        %v521 = vld [vmem:[#allocation8 + $0xf0] sm:$0xff]
        %v522 = vld [vmem:[#allocation8 + $0xf8] sm:$0xff]
        %v523 = vld [vmem:[#allocation8 + $0x100] sm:$0xff]
        %v524 = vld [vmem:[#allocation8 + $0x108] sm:$0xff]
        %v525 = vld [vmem:[#allocation8 + $0x110] sm:$0xff]
        %v526 = vld [vmem:[#allocation8 + $0x118] sm:$0xff]
        %v527 = vld [vmem:[#allocation8 + $0x120] sm:$0xff]
        %v528 = vld [vmem:[#allocation8 + $0x128] sm:$0xff]
        %v529 = vld [vmem:[#allocation8 + $0x130] sm:$0xff]
        %v530 = vld [vmem:[#allocation8 + $0x138] sm:$0xff]
        %v531 = vld [vmem:[#allocation8 + $0x140] sm:$0xff]
        %v532 = vld [vmem:[#allocation8 + $0x148] sm:$0xff]
        %v533 = vld [vmem:[#allocation8 + $0x150] sm:$0xff]
        %v534 = vld [vmem:[#allocation8 + $0x158] sm:$0xff]
        %v535 = vld [vmem:[#allocation8 + $0x160] sm:$0xff]
        %v536 = vld [vmem:[#allocation8 + $0x168] sm:$0xff]
        %v537 = vld [vmem:[#allocation8 + $0x170] sm:$0xff]
        %v538 = vld [vmem:[#allocation8 + $0x178] sm:$0xff]
        %v539 = vld [vmem:[#allocation8 + $0x180] sm:$0xff]
        %v540 = vld [vmem:[#allocation8 + $0x188] sm:$0xff]
        %v541 = vld [vmem:[#allocation8 + $0x190] sm:$0xff]
        %v542 = vld [vmem:[#allocation8 + $0x198] sm:$0xff]
        %v543 = vld [vmem:[#allocation8 + $0x1a0] sm:$0xff]
        %v544 = vld [vmem:[#allocation8 + $0x1a8] sm:$0xff]
        %v545 = vld [vmem:[#allocation8 + $0x1b0] sm:$0xff]
        %v546 = vld [vmem:[#allocation8 + $0x1b8] sm:$0xff]
        %v547 = vld [vmem:[#allocation8 + $0x1c0] sm:$0xff]
        %v548 = vld [vmem:[#allocation8 + $0x1c8] sm:$0xff]
        %v549 = vld [vmem:[#allocation8 + $0x1d0] sm:$0xff]
        %v550 = vld [vmem:[#allocation8 + $0x1d8] sm:$0xff]
        %v551 = vld [vmem:[#allocation8 + $0x1e0] sm:$0xff]
        %v552 = vld [vmem:[#allocation8 + $0x1e8] sm:$0xff]
        %v553 = vld [vmem:[#allocation8 + $0x1f0] sm:$0xff]
        %v554 = vld [vmem:[#allocation8 + $0x1f8] sm:$0xff]
        %v555 = vld [vmem:[#allocation8 + $0x200] sm:$0xff]
        %v556 = vld [vmem:[#allocation8 + $0x208] sm:$0xff]
        %v557 = vld [vmem:[#allocation8 + $0x210] sm:$0xff]
        %v558 = vld [vmem:[#allocation8 + $0x218] sm:$0xff]
        %v559 = vld [vmem:[#allocation8 + $0x220] sm:$0xff]
        %v560 = vld [vmem:[#allocation8 + $0x228] sm:$0xff]
        %v561 = vld [vmem:[#allocation8 + $0x230] sm:$0xff]
        %v562 = vld [vmem:[#allocation8 + $0x238] sm:$0xff]
        %v563 = vld [vmem:[#allocation8 + $0x240] sm:$0xff]
        %v564 = vld [vmem:[#allocation8 + $0x248] sm:$0xff]
        %v565 = vld [vmem:[#allocation8 + $0x250] sm:$0xff]
        %v566 = vld [vmem:[#allocation8 + $0x258] sm:$0xff]
        %v567 = vld [vmem:[#allocation8 + $0x260] sm:$0xff]
        %v568 = vld [vmem:[#allocation8 + $0x268] sm:$0xff]
        %v569 = vld [vmem:[#allocation8 + $0x270] sm:$0xff]
        %v570 = vld [vmem:[#allocation8 + $0x278] sm:$0xff]
        %v571 = vld [vmem:[#allocation8 + $0x280] sm:$0xff]
        %v572 = vld [vmem:[#allocation8 + $0x288] sm:$0xff]
        %v573 = vld [vmem:[#allocation8 + $0x290] sm:$0xff]
        %v574 = vld [vmem:[#allocation8 + $0x298] sm:$0xff]
        %v575 = vld [vmem:[#allocation8 + $0x2a0] sm:$0xff]
        %v576 = vld [vmem:[#allocation8 + $0x2a8] sm:$0xff]
        %v577 = vld [vmem:[#allocation8 + $0x2b0] sm:$0xff]
        %v578 = vld [vmem:[#allocation8 + $0x2b8] sm:$0xff]
        %v579 = vld [vmem:[#allocation8 + $0x2c0] sm:$0xff]
        %v580 = vld [vmem:[#allocation8 + $0x2c8] sm:$0xff]
        %v581 = vld [vmem:[#allocation8 + $0x2d0] sm:$0xff]
        %v582 = vld [vmem:[#allocation8 + $0x2d8] sm:$0xff]
        %v583 = vld [vmem:[#allocation8 + $0x2e0] sm:$0xff]
        %v584 = vld [vmem:[#allocation8 + $0x2e8] sm:$0xff]
        %v585 = vld [vmem:[#allocation8 + $0x2f0] sm:$0xff]
        %v586 = vld [vmem:[#allocation8 + $0x2f8] sm:$0xff]
        %v587 = vld [vmem:[#allocation8 + $0x300] sm:$0xff]
        %v588 = vld [vmem:[#allocation8 + $0x308] sm:$0xff]
        %v589 = vld [vmem:[#allocation8 + $0x310] sm:$0xff]
        %v590 = vld [vmem:[#allocation8 + $0x318] sm:$0xff]
        %v591 = vld [vmem:[#allocation8 + $0x320] sm:$0xff]
        %v592 = vld [vmem:[#allocation8 + $0x328] sm:$0xff]
        %v593 = vld [vmem:[#allocation8 + $0x330] sm:$0xff]
        %v594 = vld [vmem:[#allocation8 + $0x338] sm:$0xff]
        %v595 = vld [vmem:[#allocation8 + $0x340] sm:$0xff]
        %v596 = vld [vmem:[#allocation8 + $0x348] sm:$0xff]
        %v597 = vld [vmem:[#allocation8 + $0x350] sm:$0xff]
        %v598 = vld [vmem:[#allocation8 + $0x358] sm:$0xff]
        %v599 = vld [vmem:[#allocation8 + $0x360] sm:$0xff]
        %v600 = vld [vmem:[#allocation8 + $0x368] sm:$0xff]
        %v601 = vld [vmem:[#allocation8 + $0x370] sm:$0xff]
        %v602 = vld [vmem:[#allocation8 + $0x378] sm:$0xff]
        %v603 = vld [vmem:[#allocation8 + $0x380] sm:$0xff]
        %v604 = vld [vmem:[#allocation8 + $0x388] sm:$0xff]
        %v605 = vld [vmem:[#allocation8 + $0x390] sm:$0xff]
        %v606 = vld [vmem:[#allocation8 + $0x398] sm:$0xff]
        %v607 = vld [vmem:[#allocation8 + $0x3a0] sm:$0xff]
        %v608 = vld [vmem:[#allocation8 + $0x3a8] sm:$0xff]
        %v609 = vld [vmem:[#allocation8 + $0x3b0] sm:$0xff]
        %v610 = vld [vmem:[#allocation8 + $0x3b8] sm:$0xff]
        %v611 = vld [vmem:[#allocation8 + $0x3c0] sm:$0xff]
        %v612 = vld [vmem:[#allocation8 + $0x3c8] sm:$0xff]
        %v613 = vld [vmem:[#allocation8 + $0x3d0] sm:$0xff]
        %v614 = vld [vmem:[#allocation8 + $0x3d8] sm:$0xff]
        %v615 = vld [vmem:[#allocation8 + $0x3e0] sm:$0xff]
        %v616 = vld [vmem:[#allocation8 + $0x3e8] sm:$0xff]
        %v617 = vld [vmem:[#allocation8 + $0x3f0] sm:$0xff]
        %v618 = vld [vmem:[#allocation8 + $0x3f8] sm:$0xff]
        %v619 = vld [vmem:[#allocation8 + $0x400] sm:$0xff]
        %v620 = vld [vmem:[#allocation8 + $0x408] sm:$0xff]
        %v621 = vld [vmem:[#allocation8 + $0x410] sm:$0xff]
        %v622 = vld [vmem:[#allocation8 + $0x418] sm:$0xff]
        %v623 = vld [vmem:[#allocation8 + $0x420] sm:$0xff]
        %v624 = vld [vmem:[#allocation8 + $0x428] sm:$0xff]
        %v625 = vld [vmem:[#allocation8 + $0x430] sm:$0xff]
        %v626 = vld [vmem:[#allocation8 + $0x438] sm:$0xff]
        %v627 = vld [vmem:[#allocation8 + $0x440] sm:$0xff]
        %v628 = vld [vmem:[#allocation8 + $0x448] sm:$0xff]
        %v629 = vld [vmem:[#allocation8 + $0x450] sm:$0xff]
        %v630 = vld [vmem:[#allocation8 + $0x458] sm:$0xff]
        %v631 = vld [vmem:[#allocation8 + $0x460] sm:$0xff]
        %v632 = vld [vmem:[#allocation8 + $0x468] sm:$0xff]
        %v633 = vld [vmem:[#allocation8 + $0x470] sm:$0xff]
        %v634 = vld [vmem:[#allocation8 + $0x478] sm:$0xff]
        %v645 = vunpack.c.l.b16 %v481
        %v646 = vunpack.c.h.b16 %v481
        %v647 = vunpack.c.l.b16 %v482
        %v648 = vunpack.c.h.b16 %v482
        %v649 = vunpack.c.l.b16 %v483
        %v650 = vunpack.c.h.b16 %v483
        %v651 = vunpack.c.l.b16 %v484
        %v652 = vunpack.c.h.b16 %v484
        %v653 = vunpack.c.l.b16 %v485
        %v654 = vunpack.c.l.b16 %v486
        %v655 = vunpack.c.h.b16 %v486
        %v656 = vunpack.c.l.b16 %v487
        %v657 = vunpack.c.h.b16 %v487
        %v658 = vunpack.c.l.b16 %v488
        %v659 = vunpack.c.h.b16 %v488
        %v660 = vunpack.c.l.b16 %v489
        %v661 = vunpack.c.h.b16 %v489
        %v662 = vunpack.c.l.b16 %v490
        %v663 = vpack.c.b16 %v654, %v645
        %v664 = vpack.c.b16 %v655, %v646
        %v665 = vpack.c.b16 %v656, %v647
        %v666 = vpack.c.b16 %v657, %v648
        %v667 = vpack.c.b16 %v658, %v649
        %v668 = vpack.c.b16 %v659, %v650
        %v669 = vpack.c.b16 %v660, %v651
        %v670 = vpack.c.b16 %v661, %v652
        %v671 = vpack.c.b16 %v662, %v653
        %v825 = vunpack.c.l.b16 %v491
        %v826 = vunpack.c.h.b16 %v491
        %v827 = vunpack.c.l.b16 %v492
        %v828 = vunpack.c.h.b16 %v492
        %v829 = vunpack.c.l.b16 %v493
        %v830 = vunpack.c.h.b16 %v493
        %v831 = vunpack.c.l.b16 %v494
        %v832 = vunpack.c.h.b16 %v494
        %v833 = vunpack.c.l.b16 %v495
        %v834 = vunpack.c.h.b16 %v495
        %v835 = vunpack.c.l.b16 %v496
        %v836 = vunpack.c.h.b16 %v496
        %v837 = vunpack.c.l.b16 %v497
        %v838 = vunpack.c.h.b16 %v497
        %v839 = vunpack.c.l.b16 %v498
        %v840 = vunpack.c.h.b16 %v498
        %v841 = vunpack.c.l.b16 %v499
        %v842 = vunpack.c.h.b16 %v499
        %v843 = vunpack.c.l.b16 %v500
        %v844 = vunpack.c.h.b16 %v500
        %v845 = vunpack.c.l.b16 %v501
        %v846 = vunpack.c.h.b16 %v501
        %v847 = vunpack.c.l.b16 %v502
        %v848 = vunpack.c.h.b16 %v502
        %v849 = vunpack.c.l.b16 %v503
        %v850 = vunpack.c.h.b16 %v503
        %v851 = vunpack.c.l.b16 %v504
        %v852 = vunpack.c.h.b16 %v504
        %v853 = vunpack.c.l.b16 %v505
        %v854 = vunpack.c.h.b16 %v505
        %v855 = vunpack.c.l.b16 %v506
        %v856 = vunpack.c.h.b16 %v506
        %v857 = vunpack.c.l.b16 %v507
        %v858 = vunpack.c.h.b16 %v507
        %v859 = vunpack.c.l.b16 %v508
        %v860 = vunpack.c.h.b16 %v508
        %v861 = vunpack.c.l.b16 %v509
        %v862 = vunpack.c.h.b16 %v509
        %v863 = vunpack.c.l.b16 %v510
        %v864 = vunpack.c.h.b16 %v510
        %v865 = vunpack.c.l.b16 %v511
        %v866 = vunpack.c.h.b16 %v511
        %v867 = vunpack.c.l.b16 %v512
        %v868 = vunpack.c.h.b16 %v512
        %v869 = vunpack.c.l.b16 %v513
        %v870 = vunpack.c.h.b16 %v513
        %v871 = vunpack.c.l.b16 %v514
        %v872 = vunpack.c.h.b16 %v514
        %v873 = vunpack.c.l.b16 %v515
        %v874 = vunpack.c.h.b16 %v515
        %v875 = vunpack.c.l.b16 %v516
        %v876 = vunpack.c.h.b16 %v516
        %v877 = vunpack.c.l.b16 %v517
        %v878 = vunpack.c.h.b16 %v517
        %v879 = vunpack.c.l.b16 %v518
        %v880 = vunpack.c.h.b16 %v518
        %v881 = vunpack.c.l.b16 %v519
        %v882 = vunpack.c.h.b16 %v519
        %v883 = vunpack.c.l.b16 %v520
        %v884 = vunpack.c.h.b16 %v520
        %v885 = vunpack.c.l.b16 %v521
        %v886 = vunpack.c.h.b16 %v521
        %v887 = vunpack.c.l.b16 %v522
        %v888 = vunpack.c.h.b16 %v522
        %v889 = vunpack.c.l.b16 %v523
        %v890 = vunpack.c.h.b16 %v523
        %v891 = vunpack.c.l.b16 %v524
        %v892 = vunpack.c.h.b16 %v524
        %v893 = vunpack.c.l.b16 %v525
        %v894 = vunpack.c.h.b16 %v525
        %v895 = vunpack.c.l.b16 %v526
        %v896 = vunpack.c.h.b16 %v526
        %v897 = vunpack.c.l.b16 %v527
        %v898 = vunpack.c.h.b16 %v527
        %v899 = vunpack.c.l.b16 %v528
        %v900 = vunpack.c.h.b16 %v528
        %v901 = vunpack.c.l.b16 %v529
        %v902 = vunpack.c.h.b16 %v529
        %v903 = vunpack.c.l.b16 %v530
        %v904 = vunpack.c.h.b16 %v530
        %v905 = vunpack.c.l.b16 %v531
        %v906 = vunpack.c.h.b16 %v531
        %v907 = vunpack.c.l.b16 %v532
        %v908 = vunpack.c.h.b16 %v532
        %v909 = vunpack.c.l.b16 %v533
        %v910 = vunpack.c.h.b16 %v533
        %v911 = vunpack.c.l.b16 %v534
        %v912 = vunpack.c.h.b16 %v534
        %v913 = vunpack.c.l.b16 %v535
        %v914 = vunpack.c.h.b16 %v535
        %v915 = vunpack.c.l.b16 %v536
        %v916 = vunpack.c.h.b16 %v536
        %v917 = vunpack.c.l.b16 %v537
        %v918 = vunpack.c.h.b16 %v537
        %v919 = vunpack.c.l.b16 %v538
        %v920 = vunpack.c.h.b16 %v538
        %v921 = vunpack.c.l.b16 %v539
        %v922 = vunpack.c.h.b16 %v539
        %v923 = vunpack.c.l.b16 %v540
        %v924 = vunpack.c.h.b16 %v540
        %v925 = vunpack.c.l.b16 %v541
        %v926 = vunpack.c.h.b16 %v541
        %v927 = vunpack.c.l.b16 %v542
        %v928 = vunpack.c.h.b16 %v542
        %v929 = vunpack.c.l.b16 %v543
        %v930 = vunpack.c.h.b16 %v543
        %v931 = vunpack.c.l.b16 %v544
        %v932 = vunpack.c.h.b16 %v544
        %v933 = vunpack.c.l.b16 %v545
        %v934 = vunpack.c.h.b16 %v545
        %v935 = vunpack.c.l.b16 %v546
        %v936 = vunpack.c.h.b16 %v546
        %v937 = vunpack.c.l.b16 %v547
        %v938 = vunpack.c.h.b16 %v547
        %v939 = vunpack.c.l.b16 %v548
        %v940 = vunpack.c.h.b16 %v548
        %v941 = vunpack.c.l.b16 %v549
        %v942 = vunpack.c.h.b16 %v549
        %v943 = vunpack.c.l.b16 %v550
        %v944 = vunpack.c.h.b16 %v550
        %v945 = vunpack.c.l.b16 %v551
        %v946 = vunpack.c.h.b16 %v551
        %v947 = vunpack.c.l.b16 %v552
        %v948 = vunpack.c.h.b16 %v552
        %v949 = vunpack.c.l.b16 %v553
        %v950 = vunpack.c.h.b16 %v553
        %v951 = vunpack.c.l.b16 %v554
        %v952 = vunpack.c.h.b16 %v554
        %v953 = vunpack.c.l.b16 %v555
        %v954 = vunpack.c.h.b16 %v555
        %v955 = vunpack.c.l.b16 %v556
        %v956 = vunpack.c.h.b16 %v556
        %v957 = vunpack.c.l.b16 %v557
        %v958 = vunpack.c.h.b16 %v557
        %v959 = vunpack.c.l.b16 %v558
        %v960 = vunpack.c.h.b16 %v558
        %v961 = vunpack.c.l.b16 %v559
        %v962 = vunpack.c.h.b16 %v559
        %v963 = vunpack.c.l.b16 %v560
        %v964 = vunpack.c.h.b16 %v560
        %v965 = vunpack.c.l.b16 %v561
        %v966 = vunpack.c.h.b16 %v561
        %v967 = vunpack.c.l.b16 %v562
        %v968 = vunpack.c.h.b16 %v562
        %v969 = vunpack.c.l.b16 %v563
        %v970 = vunpack.c.h.b16 %v563
        %v971 = vunpack.c.l.b16 %v564
        %v972 = vunpack.c.h.b16 %v564
        %v973 = vunpack.c.l.b16 %v565
        %v974 = vunpack.c.h.b16 %v565
        %v975 = vunpack.c.l.b16 %v566
        %v976 = vunpack.c.h.b16 %v566
        %v977 = vunpack.c.l.b16 %v567
        %v978 = vunpack.c.h.b16 %v567
        %v979 = vunpack.c.l.b16 %v568
        %v980 = vunpack.c.h.b16 %v568
        %v981 = vunpack.c.l.b16 %v569
        %v982 = vunpack.c.h.b16 %v569
        %v983 = vunpack.c.l.b16 %v570
        %v984 = vunpack.c.h.b16 %v570
        %v985 = vunpack.c.l.b16 %v571
        %v986 = vunpack.c.h.b16 %v571
        %v987 = vunpack.c.l.b16 %v572
        %v988 = vunpack.c.h.b16 %v572
        %v989 = vunpack.c.l.b16 %v573
        %v990 = vunpack.c.h.b16 %v573
        %v991 = vunpack.c.l.b16 %v574
        %v992 = vunpack.c.h.b16 %v574
        %v993 = vunpack.c.l.b16 %v575
        %v994 = vunpack.c.h.b16 %v575
        %v995 = vunpack.c.l.b16 %v576
        %v996 = vunpack.c.h.b16 %v576
        %v997 = vunpack.c.l.b16 %v577
        %v998 = vunpack.c.h.b16 %v577
        %v999 = vunpack.c.l.b16 %v578
        %v1000 = vunpack.c.h.b16 %v578
        %v1001 = vunpack.c.l.b16 %v579
        %v1002 = vunpack.c.h.b16 %v579
        %v1003 = vunpack.c.l.b16 %v580
        %v1004 = vunpack.c.h.b16 %v580
        %v1005 = vunpack.c.l.b16 %v581
        %v1006 = vunpack.c.h.b16 %v581
        %v1007 = vunpack.c.l.b16 %v582
        %v1008 = vunpack.c.h.b16 %v582
        %v1009 = vunpack.c.l.b16 %v583
        %v1010 = vunpack.c.h.b16 %v583
        %v1011 = vunpack.c.l.b16 %v584
        %v1012 = vunpack.c.h.b16 %v584
        %v1013 = vunpack.c.l.b16 %v585
        %v1014 = vunpack.c.h.b16 %v585
        %v1015 = vunpack.c.l.b16 %v586
        %v1016 = vunpack.c.h.b16 %v586
        %v1017 = vunpack.c.l.b16 %v587
        %v1018 = vunpack.c.h.b16 %v587
        %v1019 = vunpack.c.l.b16 %v588
        %v1020 = vunpack.c.h.b16 %v588
        %v1021 = vunpack.c.l.b16 %v589
        %v1022 = vunpack.c.h.b16 %v589
        %v1023 = vunpack.c.l.b16 %v590
        %v1024 = vunpack.c.h.b16 %v590
        %v1025 = vunpack.c.l.b16 %v591
        %v1026 = vunpack.c.h.b16 %v591
        %v1027 = vunpack.c.l.b16 %v592
        %v1028 = vunpack.c.h.b16 %v592
        %v1029 = vunpack.c.l.b16 %v593
        %v1030 = vunpack.c.h.b16 %v593
        %v1031 = vunpack.c.l.b16 %v594
        %v1032 = vunpack.c.h.b16 %v594
        %v1033 = vunpack.c.l.b16 %v595
        %v1034 = vunpack.c.h.b16 %v595
        %v1035 = vunpack.c.l.b16 %v596
        %v1036 = vunpack.c.h.b16 %v596
        %v1037 = vunpack.c.l.b16 %v597
        %v1038 = vunpack.c.h.b16 %v597
        %v1039 = vunpack.c.l.b16 %v598
        %v1040 = vunpack.c.h.b16 %v598
        %v1041 = vunpack.c.l.b16 %v599
        %v1042 = vunpack.c.h.b16 %v599
        %v1043 = vunpack.c.l.b16 %v600
        %v1044 = vunpack.c.h.b16 %v600
        %v1045 = vunpack.c.l.b16 %v601
        %v1046 = vunpack.c.h.b16 %v601
        %v1047 = vunpack.c.l.b16 %v602
        %v1048 = vunpack.c.h.b16 %v602
        %v1049 = vunpack.c.l.b16 %v603
        %v1050 = vunpack.c.h.b16 %v603
        %v1051 = vunpack.c.l.b16 %v604
        %v1052 = vunpack.c.h.b16 %v604
        %v1053 = vunpack.c.l.b16 %v605
        %v1054 = vunpack.c.h.b16 %v605
        %v1055 = vunpack.c.l.b16 %v606
        %v1056 = vunpack.c.h.b16 %v606
        %v1057 = vunpack.c.l.b16 %v607
        %v1058 = vunpack.c.h.b16 %v607
        %v1059 = vunpack.c.l.b16 %v608
        %v1060 = vunpack.c.h.b16 %v608
        %v1061 = vunpack.c.l.b16 %v609
        %v1062 = vunpack.c.h.b16 %v609
        %v1063 = vunpack.c.l.b16 %v610
        %v1064 = vunpack.c.h.b16 %v610
        %v1065 = vunpack.c.l.b16 %v611
        %v1066 = vunpack.c.h.b16 %v611
        %v1067 = vunpack.c.l.b16 %v612
        %v1068 = vunpack.c.h.b16 %v612
        %v1069 = vunpack.c.l.b16 %v613
        %v1070 = vunpack.c.h.b16 %v613
        %v1071 = vunpack.c.l.b16 %v614
        %v1072 = vunpack.c.h.b16 %v614
        %v1073 = vunpack.c.l.b16 %v615
        %v1074 = vunpack.c.h.b16 %v615
        %v1075 = vunpack.c.l.b16 %v616
        %v1076 = vunpack.c.h.b16 %v616
        %v1077 = vunpack.c.l.b16 %v617
        %v1078 = vunpack.c.h.b16 %v617
        %v1079 = vunpack.c.l.b16 %v618
        %v1080 = vunpack.c.h.b16 %v618
        %v1081 = vunpack.c.l.b16 %v619
        %v1082 = vunpack.c.h.b16 %v619
        %v1083 = vunpack.c.l.b16 %v620
        %v1084 = vunpack.c.h.b16 %v620
        %v1085 = vunpack.c.l.b16 %v621
        %v1086 = vunpack.c.h.b16 %v621
        %v1087 = vunpack.c.l.b16 %v622
        %v1088 = vunpack.c.h.b16 %v622
        %v1089 = vunpack.c.l.b16 %v623
        %v1090 = vunpack.c.h.b16 %v623
        %v1091 = vunpack.c.l.b16 %v624
        %v1092 = vunpack.c.h.b16 %v624
        %v1093 = vunpack.c.l.b16 %v625
        %v1094 = vunpack.c.h.b16 %v625
        %v1095 = vunpack.c.l.b16 %v626
        %v1096 = vunpack.c.h.b16 %v626
        %v1097 = vunpack.c.l.b16 %v627
        %v1098 = vunpack.c.h.b16 %v627
        %v1099 = vunpack.c.l.b16 %v628
        %v1100 = vunpack.c.h.b16 %v628
        %v1101 = vunpack.c.l.b16 %v629
        %v1102 = vunpack.c.h.b16 %v629
        %v1103 = vunpack.c.l.b16 %v630
        %v1104 = vunpack.c.h.b16 %v630
        %v1105 = vunpack.c.l.b16 %v631
        %v1106 = vunpack.c.h.b16 %v631
        %v1107 = vunpack.c.l.b16 %v632
        %v1108 = vunpack.c.h.b16 %v632
        %v1109 = vunpack.c.l.b16 %v633
        %v1110 = vunpack.c.h.b16 %v633
        %v1111 = vunpack.c.l.b16 %v634
        %v1112 = vunpack.c.h.b16 %v634
        %v1113 = vpack.c.b16 %v827, %v825
        %v1114 = vpack.c.b16 %v828, %v826
        %v1115 = vpack.c.b16 %v831, %v829
        %v1116 = vpack.c.b16 %v832, %v830
        %v1117 = vpack.c.b16 %v835, %v833
        %v1118 = vpack.c.b16 %v836, %v834
        %v1119 = vpack.c.b16 %v839, %v837
        %v1120 = vpack.c.b16 %v840, %v838
        %v1121 = vpack.c.b16 %v843, %v841
        %v1122 = vpack.c.b16 %v844, %v842
        %v1123 = vpack.c.b16 %v847, %v845
        %v1124 = vpack.c.b16 %v848, %v846
        %v1125 = vpack.c.b16 %v851, %v849
        %v1126 = vpack.c.b16 %v852, %v850
        %v1127 = vpack.c.b16 %v855, %v853
        %v1128 = vpack.c.b16 %v856, %v854
        %v1129 = vpack.c.b16 %v859, %v857
        %v1130 = vpack.c.b16 %v860, %v858
        %v1131 = vpack.c.b16 %v863, %v861
        %v1132 = vpack.c.b16 %v864, %v862
        %v1133 = vpack.c.b16 %v867, %v865
        %v1134 = vpack.c.b16 %v868, %v866
        %v1135 = vpack.c.b16 %v871, %v869
        %v1136 = vpack.c.b16 %v872, %v870
        %v1137 = vpack.c.b16 %v875, %v873
        %v1138 = vpack.c.b16 %v876, %v874
        %v1139 = vpack.c.b16 %v879, %v877
        %v1140 = vpack.c.b16 %v880, %v878
        %v1141 = vpack.c.b16 %v883, %v881
        %v1142 = vpack.c.b16 %v884, %v882
        %v1143 = vpack.c.b16 %v887, %v885
        %v1144 = vpack.c.b16 %v888, %v886
        %v1145 = vpack.c.b16 %v891, %v889
        %v1146 = vpack.c.b16 %v892, %v890
        %v1147 = vpack.c.b16 %v895, %v893
        %v1148 = vpack.c.b16 %v896, %v894
        %v1149 = vpack.c.b16 %v899, %v897
        %v1150 = vpack.c.b16 %v900, %v898
        %v1151 = vpack.c.b16 %v903, %v901
        %v1152 = vpack.c.b16 %v904, %v902
        %v1153 = vpack.c.b16 %v907, %v905
        %v1154 = vpack.c.b16 %v908, %v906
        %v1155 = vpack.c.b16 %v911, %v909
        %v1156 = vpack.c.b16 %v912, %v910
        %v1157 = vpack.c.b16 %v915, %v913
        %v1158 = vpack.c.b16 %v916, %v914
        %v1159 = vpack.c.b16 %v919, %v917
        %v1160 = vpack.c.b16 %v920, %v918
        %v1161 = vpack.c.b16 %v923, %v921
        %v1162 = vpack.c.b16 %v924, %v922
        %v1163 = vpack.c.b16 %v927, %v925
        %v1164 = vpack.c.b16 %v928, %v926
        %v1165 = vpack.c.b16 %v931, %v929
        %v1166 = vpack.c.b16 %v932, %v930
        %v1167 = vpack.c.b16 %v935, %v933
        %v1168 = vpack.c.b16 %v936, %v934
        %v1169 = vpack.c.b16 %v939, %v937
        %v1170 = vpack.c.b16 %v940, %v938
        %v1171 = vpack.c.b16 %v943, %v941
        %v1172 = vpack.c.b16 %v944, %v942
        %v1173 = vpack.c.b16 %v947, %v945
        %v1174 = vpack.c.b16 %v948, %v946
        %v1175 = vpack.c.b16 %v951, %v949
        %v1176 = vpack.c.b16 %v952, %v950
        %v1177 = vpack.c.b16 %v955, %v953
        %v1178 = vpack.c.b16 %v956, %v954
        %v1179 = vpack.c.b16 %v959, %v957
        %v1180 = vpack.c.b16 %v960, %v958
        %v1181 = vpack.c.b16 %v963, %v961
        %v1182 = vpack.c.b16 %v964, %v962
        %v1183 = vpack.c.b16 %v967, %v965
        %v1184 = vpack.c.b16 %v968, %v966
        %v1185 = vpack.c.b16 %v971, %v969
        %v1186 = vpack.c.b16 %v972, %v970
        %v1187 = vpack.c.b16 %v975, %v973
        %v1188 = vpack.c.b16 %v976, %v974
        %v1189 = vpack.c.b16 %v979, %v977
        %v1190 = vpack.c.b16 %v980, %v978
        %v1191 = vpack.c.b16 %v983, %v981
        %v1192 = vpack.c.b16 %v984, %v982
        %v1193 = vpack.c.b16 %v987, %v985
        %v1194 = vpack.c.b16 %v988, %v986
        %v1195 = vpack.c.b16 %v991, %v989
        %v1196 = vpack.c.b16 %v992, %v990
        %v1197 = vpack.c.b16 %v995, %v993
        %v1198 = vpack.c.b16 %v996, %v994
        %v1199 = vpack.c.b16 %v999, %v997
        %v1200 = vpack.c.b16 %v1000, %v998
        %v1201 = vpack.c.b16 %v1003, %v1001
        %v1202 = vpack.c.b16 %v1004, %v1002
        %v1203 = vpack.c.b16 %v1007, %v1005
        %v1204 = vpack.c.b16 %v1008, %v1006
        %v1205 = vpack.c.b16 %v1011, %v1009
        %v1206 = vpack.c.b16 %v1012, %v1010
        %v1207 = vpack.c.b16 %v1015, %v1013
        %v1208 = vpack.c.b16 %v1016, %v1014
        %v1209 = vpack.c.b16 %v1019, %v1017
        %v1210 = vpack.c.b16 %v1020, %v1018
        %v1211 = vpack.c.b16 %v1023, %v1021
        %v1212 = vpack.c.b16 %v1024, %v1022
        %v1213 = vpack.c.b16 %v1027, %v1025
        %v1214 = vpack.c.b16 %v1028, %v1026
        %v1215 = vpack.c.b16 %v1031, %v1029
        %v1216 = vpack.c.b16 %v1032, %v1030
        %v1217 = vpack.c.b16 %v1035, %v1033
        %v1218 = vpack.c.b16 %v1036, %v1034
        %v1219 = vpack.c.b16 %v1039, %v1037
        %v1220 = vpack.c.b16 %v1040, %v1038
        %v1221 = vpack.c.b16 %v1043, %v1041
        %v1222 = vpack.c.b16 %v1044, %v1042
        %v1223 = vpack.c.b16 %v1047, %v1045
        %v1224 = vpack.c.b16 %v1048, %v1046
        %v1225 = vpack.c.b16 %v1051, %v1049
        %v1226 = vpack.c.b16 %v1052, %v1050
        %v1227 = vpack.c.b16 %v1055, %v1053
        %v1228 = vpack.c.b16 %v1056, %v1054
        %v1229 = vpack.c.b16 %v1059, %v1057
        %v1230 = vpack.c.b16 %v1060, %v1058
        %v1231 = vpack.c.b16 %v1063, %v1061
        %v1232 = vpack.c.b16 %v1064, %v1062
        %v1233 = vpack.c.b16 %v1067, %v1065
        %v1234 = vpack.c.b16 %v1068, %v1066
        %v1235 = vpack.c.b16 %v1071, %v1069
        %v1236 = vpack.c.b16 %v1072, %v1070
        %v1237 = vpack.c.b16 %v1075, %v1073
        %v1238 = vpack.c.b16 %v1076, %v1074
        %v1239 = vpack.c.b16 %v1079, %v1077
        %v1240 = vpack.c.b16 %v1080, %v1078
        %v1241 = vpack.c.b16 %v1083, %v1081
        %v1242 = vpack.c.b16 %v1084, %v1082
        %v1243 = vpack.c.b16 %v1087, %v1085
        %v1244 = vpack.c.b16 %v1088, %v1086
        %v1245 = vpack.c.b16 %v1091, %v1089
        %v1246 = vpack.c.b16 %v1092, %v1090
        %v1247 = vpack.c.b16 %v1095, %v1093
        %v1248 = vpack.c.b16 %v1096, %v1094
        %v1249 = vpack.c.b16 %v1099, %v1097
        %v1250 = vpack.c.b16 %v1100, %v1098
        %v1251 = vpack.c.b16 %v1103, %v1101
        %v1252 = vpack.c.b16 %v1104, %v1102
        %v1253 = vpack.c.b16 %v1107, %v1105
        %v1254 = vpack.c.b16 %v1108, %v1106
        %v1255 = vpack.c.b16 %v1111, %v1109
        %v1256 = vpack.c.b16 %v1112, %v1110
        %1401 = vmatpush.bf16.msra.mxu0 %v1127
        %1402 = vmatpush.bf16.msra.mxu0 %v1125
        %1403 = vmatpush.bf16.msra.mxu0 %v1123
        %1404 = vmatpush.bf16.msra.mxu0 %v1121
        %1405 = vmatpush.bf16.msra.mxu0 %v1119
        %1406 = vmatpush.bf16.msra.mxu0 %v1117
        %1407 = vmatpush.bf16.msra.mxu0 %v1115
        %1408 = vmatpush.bf16.msra.mxu0 %v1113
        %1409 = vmatmul.bf16.gmra.mxu0 %v663
        %v1410 = vpop.f32.mrf.mxu0
        %v1411 = vadd.f32 0.0, %v1410
        %v1412 = vpop.f32.mrf.mxu0
        %v1413 = vadd.f32 0.0, %v1412
        %1414 = vdwg.mxu0
        %1415 = vmatpush.bf16.msra.mxu0 %v1143
        %1416 = vmatpush.bf16.msra.mxu0 %v1141
        %1417 = vmatpush.bf16.msra.mxu0 %v1139
        %1418 = vmatpush.bf16.msra.mxu0 %v1137
        %1419 = vmatpush.bf16.msra.mxu0 %v1135
        %1420 = vmatpush.bf16.msra.mxu0 %v1133
        %1421 = vmatpush.bf16.msra.mxu0 %v1131
        %1422 = vmatpush.bf16.msra.mxu0 %v1129
        %1423 = vmatmul.bf16.gmra.mxu0 %v664
        %v1424 = vpop.f32.mrf.mxu0
        %v1425 = vadd.f32 %v1411, %v1424
        %v1426 = vpop.f32.mrf.mxu0
        %v1427 = vadd.f32 %v1413, %v1426
        %1428 = vdwg.mxu0
        %1429 = vmatpush.bf16.msra.mxu0 %v1159
        %1430 = vmatpush.bf16.msra.mxu0 %v1157
        %1431 = vmatpush.bf16.msra.mxu0 %v1155
        %1432 = vmatpush.bf16.msra.mxu0 %v1153
        %1433 = vmatpush.bf16.msra.mxu0 %v1151
        %1434 = vmatpush.bf16.msra.mxu0 %v1149
        %1435 = vmatpush.bf16.msra.mxu0 %v1147
        %1436 = vmatpush.bf16.msra.mxu0 %v1145
        %1437 = vmatmul.bf16.gmra.mxu0 %v665
        %v1438 = vpop.f32.mrf.mxu0
        %v1439 = vadd.f32 %v1425, %v1438
        %v1440 = vpop.f32.mrf.mxu0
        %v1441 = vadd.f32 %v1427, %v1440
        %1442 = vdwg.mxu0
        %1443 = vmatpush.bf16.msra.mxu0 %v1175
        %1444 = vmatpush.bf16.msra.mxu0 %v1173
        %1445 = vmatpush.bf16.msra.mxu0 %v1171
        %1446 = vmatpush.bf16.msra.mxu0 %v1169
        %1447 = vmatpush.bf16.msra.mxu0 %v1167
        %1448 = vmatpush.bf16.msra.mxu0 %v1165
        %1449 = vmatpush.bf16.msra.mxu0 %v1163
        %1450 = vmatpush.bf16.msra.mxu0 %v1161
        %1451 = vmatmul.bf16.gmra.mxu0 %v666
        %v1452 = vpop.f32.mrf.mxu0
        %v1453 = vadd.f32 %v1439, %v1452
        %v1454 = vpop.f32.mrf.mxu0
        %v1455 = vadd.f32 %v1441, %v1454
        %1456 = vdwg.mxu0
        %1457 = vmatpush.bf16.msra.mxu0 %v1191
        %1458 = vmatpush.bf16.msra.mxu0 %v1189
        %1459 = vmatpush.bf16.msra.mxu0 %v1187
        %1460 = vmatpush.bf16.msra.mxu0 %v1185
        %1461 = vmatpush.bf16.msra.mxu0 %v1183
        %1462 = vmatpush.bf16.msra.mxu0 %v1181
        %1463 = vmatpush.bf16.msra.mxu0 %v1179
        %1464 = vmatpush.bf16.msra.mxu0 %v1177
        %1465 = vmatmul.bf16.gmra.mxu0 %v667
        %v1466 = vpop.f32.mrf.mxu0
        %v1467 = vadd.f32 %v1453, %v1466
        %v1468 = vpop.f32.mrf.mxu0
        %v1469 = vadd.f32 %v1455, %v1468
        %1470 = vdwg.mxu0
        %1471 = vmatpush.bf16.msra.mxu0 %v1207
        %1472 = vmatpush.bf16.msra.mxu0 %v1205
        %1473 = vmatpush.bf16.msra.mxu0 %v1203
        %1474 = vmatpush.bf16.msra.mxu0 %v1201
        %1475 = vmatpush.bf16.msra.mxu0 %v1199
        %1476 = vmatpush.bf16.msra.mxu0 %v1197
        %1477 = vmatpush.bf16.msra.mxu0 %v1195
        %1478 = vmatpush.bf16.msra.mxu0 %v1193
        %1479 = vmatmul.bf16.gmra.mxu0 %v668
        %v1480 = vpop.f32.mrf.mxu0
        %v1481 = vadd.f32 %v1467, %v1480
        %v1482 = vpop.f32.mrf.mxu0
        %v1483 = vadd.f32 %v1469, %v1482
        %1484 = vdwg.mxu0
        %1485 = vmatpush.bf16.msra.mxu0 %v1223
        %1486 = vmatpush.bf16.msra.mxu0 %v1221
        %1487 = vmatpush.bf16.msra.mxu0 %v1219
        %1488 = vmatpush.bf16.msra.mxu0 %v1217
        %1489 = vmatpush.bf16.msra.mxu0 %v1215
        %1490 = vmatpush.bf16.msra.mxu0 %v1213
        %1491 = vmatpush.bf16.msra.mxu0 %v1211
        %1492 = vmatpush.bf16.msra.mxu0 %v1209
        %1493 = vmatmul.bf16.gmra.mxu0 %v669
        %v1494 = vpop.f32.mrf.mxu0
        %v1495 = vadd.f32 %v1481, %v1494
        %v1496 = vpop.f32.mrf.mxu0
        %v1497 = vadd.f32 %v1483, %v1496
        %1498 = vdwg.mxu0
        %1499 = vmatpush.bf16.msra.mxu0 %v1239
        %1500 = vmatpush.bf16.msra.mxu0 %v1237
        %1501 = vmatpush.bf16.msra.mxu0 %v1235
        %1502 = vmatpush.bf16.msra.mxu0 %v1233
        %1503 = vmatpush.bf16.msra.mxu0 %v1231
        %1504 = vmatpush.bf16.msra.mxu0 %v1229
        %1505 = vmatpush.bf16.msra.mxu0 %v1227
        %1506 = vmatpush.bf16.msra.mxu0 %v1225
        %1507 = vmatmul.bf16.gmra.mxu0 %v670
        %v1508 = vpop.f32.mrf.mxu0
        %v1509 = vadd.f32 %v1495, %v1508
        %v1510 = vpop.f32.mrf.mxu0
        %v1511 = vadd.f32 %v1497, %v1510
        %1512 = vdwg.mxu0
        %1513 = vmatpush.bf16.msra.mxu0 %v1255
        %1514 = vmatpush.bf16.msra.mxu0 %v1253
        %1515 = vmatpush.bf16.msra.mxu0 %v1251
        %1516 = vmatpush.bf16.msra.mxu0 %v1249
        %1517 = vmatpush.bf16.msra.mxu0 %v1247
        %1518 = vmatpush.bf16.msra.mxu0 %v1245
        %1519 = vmatpush.bf16.msra.mxu0 %v1243
        %1520 = vmatpush.bf16.msra.mxu0 %v1241
        %1521 = vmatmul.bf16.gmra.mxu0 %v671
        %v1522 = vpop.f32.mrf.mxu0
        %v1523 = vadd.f32 %v1509, %v1522
        %v1524 = vpop.f32.mrf.mxu0
        %v1525 = vadd.f32 %v1511, %v1524
        %1526 = vdwg.mxu0
        %1527 = vmatpush.bf16.msra.mxu0 %v1128
        %1528 = vmatpush.bf16.msra.mxu0 %v1126
        %1529 = vmatpush.bf16.msra.mxu0 %v1124
        %1530 = vmatpush.bf16.msra.mxu0 %v1122
        %1531 = vmatpush.bf16.msra.mxu0 %v1120
        %1532 = vmatpush.bf16.msra.mxu0 %v1118
        %1533 = vmatpush.bf16.msra.mxu0 %v1116
        %1534 = vmatpush.bf16.msra.mxu0 %v1114
        %1535 = vmatmul.bf16.gmra.mxu0 %v663
        %v1536 = vpop.f32.mrf.mxu0
        %v1537 = vadd.f32 0.0, %v1536
        %v1538 = vpop.f32.mrf.mxu0
        %v1539 = vadd.f32 0.0, %v1538
        %1540 = vdwg.mxu0
        %1541 = vmatpush.bf16.msra.mxu0 %v1144
        %1542 = vmatpush.bf16.msra.mxu0 %v1142
        %1543 = vmatpush.bf16.msra.mxu0 %v1140
        %1544 = vmatpush.bf16.msra.mxu0 %v1138
        %1545 = vmatpush.bf16.msra.mxu0 %v1136
        %1546 = vmatpush.bf16.msra.mxu0 %v1134
        %1547 = vmatpush.bf16.msra.mxu0 %v1132
        %1548 = vmatpush.bf16.msra.mxu0 %v1130
        %1549 = vmatmul.bf16.gmra.mxu0 %v664
        %v1550 = vpop.f32.mrf.mxu0
        %v1551 = vadd.f32 %v1537, %v1550
        %v1552 = vpop.f32.mrf.mxu0
        %v1553 = vadd.f32 %v1539, %v1552
        %1554 = vdwg.mxu0
        %1555 = vmatpush.bf16.msra.mxu0 %v1160
        %1556 = vmatpush.bf16.msra.mxu0 %v1158
        %1557 = vmatpush.bf16.msra.mxu0 %v1156
        %1558 = vmatpush.bf16.msra.mxu0 %v1154
        %1559 = vmatpush.bf16.msra.mxu0 %v1152
        %1560 = vmatpush.bf16.msra.mxu0 %v1150
        %1561 = vmatpush.bf16.msra.mxu0 %v1148
        %1562 = vmatpush.bf16.msra.mxu0 %v1146
        %1563 = vmatmul.bf16.gmra.mxu0 %v665
        %v1564 = vpop.f32.mrf.mxu0
        %v1565 = vadd.f32 %v1551, %v1564
        %v1566 = vpop.f32.mrf.mxu0
        %v1567 = vadd.f32 %v1553, %v1566
        %1568 = vdwg.mxu0
        %1569 = vmatpush.bf16.msra.mxu0 %v1176
        %1570 = vmatpush.bf16.msra.mxu0 %v1174
        %1571 = vmatpush.bf16.msra.mxu0 %v1172
        %1572 = vmatpush.bf16.msra.mxu0 %v1170
        %1573 = vmatpush.bf16.msra.mxu0 %v1168
        %1574 = vmatpush.bf16.msra.mxu0 %v1166
        %1575 = vmatpush.bf16.msra.mxu0 %v1164
        %1576 = vmatpush.bf16.msra.mxu0 %v1162
        %1577 = vmatmul.bf16.gmra.mxu0 %v666
        %v1578 = vpop.f32.mrf.mxu0
        %v1579 = vadd.f32 %v1565, %v1578
        %v1580 = vpop.f32.mrf.mxu0
        %v1581 = vadd.f32 %v1567, %v1580
        %1582 = vdwg.mxu0
        %1583 = vmatpush.bf16.msra.mxu0 %v1192
        %1584 = vmatpush.bf16.msra.mxu0 %v1190
        %1585 = vmatpush.bf16.msra.mxu0 %v1188
        %1586 = vmatpush.bf16.msra.mxu0 %v1186
        %1587 = vmatpush.bf16.msra.mxu0 %v1184
        %1588 = vmatpush.bf16.msra.mxu0 %v1182
        %1589 = vmatpush.bf16.msra.mxu0 %v1180
        %1590 = vmatpush.bf16.msra.mxu0 %v1178
        %1591 = vmatmul.bf16.gmra.mxu0 %v667
        %v1592 = vpop.f32.mrf.mxu0
        %v1593 = vadd.f32 %v1579, %v1592
        %v1594 = vpop.f32.mrf.mxu0
        %v1595 = vadd.f32 %v1581, %v1594
        %1596 = vdwg.mxu0
        %1597 = vmatpush.bf16.msra.mxu0 %v1208
        %1598 = vmatpush.bf16.msra.mxu0 %v1206
        %1599 = vmatpush.bf16.msra.mxu0 %v1204
        %1600 = vmatpush.bf16.msra.mxu0 %v1202
        %1601 = vmatpush.bf16.msra.mxu0 %v1200
        %1602 = vmatpush.bf16.msra.mxu0 %v1198
        %1603 = vmatpush.bf16.msra.mxu0 %v1196
        %1604 = vmatpush.bf16.msra.mxu0 %v1194
        %1605 = vmatmul.bf16.gmra.mxu0 %v668
        %v1606 = vpop.f32.mrf.mxu0
        %v1607 = vadd.f32 %v1593, %v1606
        %v1608 = vpop.f32.mrf.mxu0
        %v1609 = vadd.f32 %v1595, %v1608
        %1610 = vdwg.mxu0
        %1611 = vmatpush.bf16.msra.mxu0 %v1224
        %1612 = vmatpush.bf16.msra.mxu0 %v1222
        %1613 = vmatpush.bf16.msra.mxu0 %v1220
        %1614 = vmatpush.bf16.msra.mxu0 %v1218
        %1615 = vmatpush.bf16.msra.mxu0 %v1216
        %1616 = vmatpush.bf16.msra.mxu0 %v1214
        %1617 = vmatpush.bf16.msra.mxu0 %v1212
        %1618 = vmatpush.bf16.msra.mxu0 %v1210
        %1619 = vmatmul.bf16.gmra.mxu0 %v669
        %v1620 = vpop.f32.mrf.mxu0
        %v1621 = vadd.f32 %v1607, %v1620
        %v1622 = vpop.f32.mrf.mxu0
        %v1623 = vadd.f32 %v1609, %v1622
        %1624 = vdwg.mxu0
        %1625 = vmatpush.bf16.msra.mxu0 %v1240
        %1626 = vmatpush.bf16.msra.mxu0 %v1238
        %1627 = vmatpush.bf16.msra.mxu0 %v1236
        %1628 = vmatpush.bf16.msra.mxu0 %v1234
        %1629 = vmatpush.bf16.msra.mxu0 %v1232
        %1630 = vmatpush.bf16.msra.mxu0 %v1230
        %1631 = vmatpush.bf16.msra.mxu0 %v1228
        %1632 = vmatpush.bf16.msra.mxu0 %v1226
        %1633 = vmatmul.bf16.gmra.mxu0 %v670
        %v1634 = vpop.f32.mrf.mxu0
        %v1635 = vadd.f32 %v1621, %v1634
        %v1636 = vpop.f32.mrf.mxu0
        %v1637 = vadd.f32 %v1623, %v1636
        %1638 = vdwg.mxu0
        %1639 = vmatpush.bf16.msra.mxu0 %v1256
        %1640 = vmatpush.bf16.msra.mxu0 %v1254
        %1641 = vmatpush.bf16.msra.mxu0 %v1252
        %1642 = vmatpush.bf16.msra.mxu0 %v1250
        %1643 = vmatpush.bf16.msra.mxu0 %v1248
        %1644 = vmatpush.bf16.msra.mxu0 %v1246
        %1645 = vmatpush.bf16.msra.mxu0 %v1244
        %1646 = vmatpush.bf16.msra.mxu0 %v1242
        %1647 = vmatmul.bf16.gmra.mxu0 %v671
        %v1648 = vpop.f32.mrf.mxu0
        %v1649 = vadd.f32 %v1635, %v1648
        %v1650 = vpop.f32.mrf.mxu0
        %v1651 = vadd.f32 %v1637, %v1650
        %1652 = vdwg.mxu0
        %v1663 = vunpack.c.l.b16 %v327
        %v1664 = vunpack.c.h.b16 %v327
        %v1665 = vunpack.c.l.b16 %v328
        %v1666 = vunpack.c.h.b16 %v328
        %v1667 = vunpack.c.l.b16 %v329
        %v1668 = vunpack.c.h.b16 %v329
        %v1669 = vunpack.c.l.b16 %v330
        %v1670 = vunpack.c.h.b16 %v330
        %v1671 = vunpack.c.l.b16 %v331
        %v1672 = vunpack.c.l.b16 %v332
        %v1673 = vunpack.c.h.b16 %v332
        %v1674 = vunpack.c.l.b16 %v333
        %v1675 = vunpack.c.h.b16 %v333
        %v1676 = vunpack.c.l.b16 %v334
        %v1677 = vunpack.c.h.b16 %v334
        %v1678 = vunpack.c.l.b16 %v335
        %v1679 = vunpack.c.h.b16 %v335
        %v1680 = vunpack.c.l.b16 %v336
        %v1681 = vpack.c.b16 %v1672, %v1663
        %v1682 = vpack.c.b16 %v1673, %v1664
        %v1683 = vpack.c.b16 %v1674, %v1665
        %v1684 = vpack.c.b16 %v1675, %v1666
        %v1685 = vpack.c.b16 %v1676, %v1667
        %v1686 = vpack.c.b16 %v1677, %v1668
        %v1687 = vpack.c.b16 %v1678, %v1669
        %v1688 = vpack.c.b16 %v1679, %v1670
        %v1689 = vpack.c.b16 %v1680, %v1671
        %v1843 = vunpack.c.l.b16 %v337
        %v1844 = vunpack.c.h.b16 %v337
        %v1845 = vunpack.c.l.b16 %v338
        %v1846 = vunpack.c.h.b16 %v338
        %v1847 = vunpack.c.l.b16 %v339
        %v1848 = vunpack.c.h.b16 %v339
        %v1849 = vunpack.c.l.b16 %v340
        %v1850 = vunpack.c.h.b16 %v340
        %v1851 = vunpack.c.l.b16 %v341
        %v1852 = vunpack.c.h.b16 %v341
        %v1853 = vunpack.c.l.b16 %v342
        %v1854 = vunpack.c.h.b16 %v342
        %v1855 = vunpack.c.l.b16 %v343
        %v1856 = vunpack.c.h.b16 %v343
        %v1857 = vunpack.c.l.b16 %v344
        %v1858 = vunpack.c.h.b16 %v344
        %v1859 = vunpack.c.l.b16 %v345
        %v1860 = vunpack.c.h.b16 %v345
        %v1861 = vunpack.c.l.b16 %v346
        %v1862 = vunpack.c.h.b16 %v346
        %v1863 = vunpack.c.l.b16 %v347
        %v1864 = vunpack.c.h.b16 %v347
        %v1865 = vunpack.c.l.b16 %v348
        %v1866 = vunpack.c.h.b16 %v348
        %v1867 = vunpack.c.l.b16 %v349
        %v1868 = vunpack.c.h.b16 %v349
        %v1869 = vunpack.c.l.b16 %v350
        %v1870 = vunpack.c.h.b16 %v350
        %v1871 = vunpack.c.l.b16 %v351
        %v1872 = vunpack.c.h.b16 %v351
        %v1873 = vunpack.c.l.b16 %v352
        %v1874 = vunpack.c.h.b16 %v352
        %v1875 = vunpack.c.l.b16 %v353
        %v1876 = vunpack.c.h.b16 %v353
        %v1877 = vunpack.c.l.b16 %v354
        %v1878 = vunpack.c.h.b16 %v354
        %v1879 = vunpack.c.l.b16 %v355
        %v1880 = vunpack.c.h.b16 %v355
        %v1881 = vunpack.c.l.b16 %v356
        %v1882 = vunpack.c.h.b16 %v356
        %v1883 = vunpack.c.l.b16 %v357
        %v1884 = vunpack.c.h.b16 %v357
        %v1885 = vunpack.c.l.b16 %v358
        %v1886 = vunpack.c.h.b16 %v358
        %v1887 = vunpack.c.l.b16 %v359
        %v1888 = vunpack.c.h.b16 %v359
        %v1889 = vunpack.c.l.b16 %v360
        %v1890 = vunpack.c.h.b16 %v360
        %v1891 = vunpack.c.l.b16 %v361
        %v1892 = vunpack.c.h.b16 %v361
        %v1893 = vunpack.c.l.b16 %v362
        %v1894 = vunpack.c.h.b16 %v362
        %v1895 = vunpack.c.l.b16 %v363
        %v1896 = vunpack.c.h.b16 %v363
        %v1897 = vunpack.c.l.b16 %v364
        %v1898 = vunpack.c.h.b16 %v364
        %v1899 = vunpack.c.l.b16 %v365
        %v1900 = vunpack.c.h.b16 %v365
        %v1901 = vunpack.c.l.b16 %v366
        %v1902 = vunpack.c.h.b16 %v366
        %v1903 = vunpack.c.l.b16 %v367
        %v1904 = vunpack.c.h.b16 %v367
        %v1905 = vunpack.c.l.b16 %v368
        %v1906 = vunpack.c.h.b16 %v368
        %v1907 = vunpack.c.l.b16 %v369
        %v1908 = vunpack.c.h.b16 %v369
        %v1909 = vunpack.c.l.b16 %v370
        %v1910 = vunpack.c.h.b16 %v370
        %v1911 = vunpack.c.l.b16 %v371
        %v1912 = vunpack.c.h.b16 %v371
        %v1913 = vunpack.c.l.b16 %v372
        %v1914 = vunpack.c.h.b16 %v372
        %v1915 = vunpack.c.l.b16 %v373
        %v1916 = vunpack.c.h.b16 %v373
        %v1917 = vunpack.c.l.b16 %v374
        %v1918 = vunpack.c.h.b16 %v374
        %v1919 = vunpack.c.l.b16 %v375
        %v1920 = vunpack.c.h.b16 %v375
        %v1921 = vunpack.c.l.b16 %v376
        %v1922 = vunpack.c.h.b16 %v376
        %v1923 = vunpack.c.l.b16 %v377
        %v1924 = vunpack.c.h.b16 %v377
        %v1925 = vunpack.c.l.b16 %v378
        %v1926 = vunpack.c.h.b16 %v378
        %v1927 = vunpack.c.l.b16 %v379
        %v1928 = vunpack.c.h.b16 %v379
        %v1929 = vunpack.c.l.b16 %v380
        %v1930 = vunpack.c.h.b16 %v380
        %v1931 = vunpack.c.l.b16 %v381
        %v1932 = vunpack.c.h.b16 %v381
        %v1933 = vunpack.c.l.b16 %v382
        %v1934 = vunpack.c.h.b16 %v382
        %v1935 = vunpack.c.l.b16 %v383
        %v1936 = vunpack.c.h.b16 %v383
        %v1937 = vunpack.c.l.b16 %v384
        %v1938 = vunpack.c.h.b16 %v384
        %v1939 = vunpack.c.l.b16 %v385
        %v1940 = vunpack.c.h.b16 %v385
        %v1941 = vunpack.c.l.b16 %v386
        %v1942 = vunpack.c.h.b16 %v386
        %v1943 = vunpack.c.l.b16 %v387
        %v1944 = vunpack.c.h.b16 %v387
        %v1945 = vunpack.c.l.b16 %v388
        %v1946 = vunpack.c.h.b16 %v388
        %v1947 = vunpack.c.l.b16 %v389
        %v1948 = vunpack.c.h.b16 %v389
        %v1949 = vunpack.c.l.b16 %v390
        %v1950 = vunpack.c.h.b16 %v390
        %v1951 = vunpack.c.l.b16 %v391
        %v1952 = vunpack.c.h.b16 %v391
        %v1953 = vunpack.c.l.b16 %v392
        %v1954 = vunpack.c.h.b16 %v392
        %v1955 = vunpack.c.l.b16 %v393
        %v1956 = vunpack.c.h.b16 %v393
        %v1957 = vunpack.c.l.b16 %v394
        %v1958 = vunpack.c.h.b16 %v394
        %v1959 = vunpack.c.l.b16 %v395
        %v1960 = vunpack.c.h.b16 %v395
        %v1961 = vunpack.c.l.b16 %v396
        %v1962 = vunpack.c.h.b16 %v396
        %v1963 = vunpack.c.l.b16 %v397
        %v1964 = vunpack.c.h.b16 %v397
        %v1965 = vunpack.c.l.b16 %v398
        %v1966 = vunpack.c.h.b16 %v398
        %v1967 = vunpack.c.l.b16 %v399
        %v1968 = vunpack.c.h.b16 %v399
        %v1969 = vunpack.c.l.b16 %v400
        %v1970 = vunpack.c.h.b16 %v400
        %v1971 = vunpack.c.l.b16 %v401
        %v1972 = vunpack.c.h.b16 %v401
        %v1973 = vunpack.c.l.b16 %v402
        %v1974 = vunpack.c.h.b16 %v402
        %v1975 = vunpack.c.l.b16 %v403
        %v1976 = vunpack.c.h.b16 %v403
        %v1977 = vunpack.c.l.b16 %v404
        %v1978 = vunpack.c.h.b16 %v404
        %v1979 = vunpack.c.l.b16 %v405
        %v1980 = vunpack.c.h.b16 %v405
        %v1981 = vunpack.c.l.b16 %v406
        %v1982 = vunpack.c.h.b16 %v406
        %v1983 = vunpack.c.l.b16 %v407
        %v1984 = vunpack.c.h.b16 %v407
        %v1985 = vunpack.c.l.b16 %v408
        %v1986 = vunpack.c.h.b16 %v408
        %v1987 = vunpack.c.l.b16 %v409
        %v1988 = vunpack.c.h.b16 %v409
        %v1989 = vunpack.c.l.b16 %v410
        %v1990 = vunpack.c.h.b16 %v410
        %v1991 = vunpack.c.l.b16 %v411
        %v1992 = vunpack.c.h.b16 %v411
        %v1993 = vunpack.c.l.b16 %v412
        %v1994 = vunpack.c.h.b16 %v412
        %v1995 = vunpack.c.l.b16 %v413
        %v1996 = vunpack.c.h.b16 %v413
        %v1997 = vunpack.c.l.b16 %v414
        %v1998 = vunpack.c.h.b16 %v414
        %v1999 = vunpack.c.l.b16 %v415
        %v2000 = vunpack.c.h.b16 %v415
        %v2001 = vunpack.c.l.b16 %v416
        %v2002 = vunpack.c.h.b16 %v416
        %v2003 = vunpack.c.l.b16 %v417
        %v2004 = vunpack.c.h.b16 %v417
        %v2005 = vunpack.c.l.b16 %v418
        %v2006 = vunpack.c.h.b16 %v418
        %v2007 = vunpack.c.l.b16 %v419
        %v2008 = vunpack.c.h.b16 %v419
        %v2009 = vunpack.c.l.b16 %v420
        %v2010 = vunpack.c.h.b16 %v420
        %v2011 = vunpack.c.l.b16 %v421
        %v2012 = vunpack.c.h.b16 %v421
        %v2013 = vunpack.c.l.b16 %v422
        %v2014 = vunpack.c.h.b16 %v422
        %v2015 = vunpack.c.l.b16 %v423
        %v2016 = vunpack.c.h.b16 %v423
        %v2017 = vunpack.c.l.b16 %v424
        %v2018 = vunpack.c.h.b16 %v424
        %v2019 = vunpack.c.l.b16 %v425
        %v2020 = vunpack.c.h.b16 %v425
        %v2021 = vunpack.c.l.b16 %v426
        %v2022 = vunpack.c.h.b16 %v426
        %v2023 = vunpack.c.l.b16 %v427
        %v2024 = vunpack.c.h.b16 %v427
        %v2025 = vunpack.c.l.b16 %v428
        %v2026 = vunpack.c.h.b16 %v428
        %v2027 = vunpack.c.l.b16 %v429
        %v2028 = vunpack.c.h.b16 %v429
        %v2029 = vunpack.c.l.b16 %v430
        %v2030 = vunpack.c.h.b16 %v430
        %v2031 = vunpack.c.l.b16 %v431
        %v2032 = vunpack.c.h.b16 %v431
        %v2033 = vunpack.c.l.b16 %v432
        %v2034 = vunpack.c.h.b16 %v432
        %v2035 = vunpack.c.l.b16 %v433
        %v2036 = vunpack.c.h.b16 %v433
        %v2037 = vunpack.c.l.b16 %v434
        %v2038 = vunpack.c.h.b16 %v434
        %v2039 = vunpack.c.l.b16 %v435
        %v2040 = vunpack.c.h.b16 %v435
        %v2041 = vunpack.c.l.b16 %v436
        %v2042 = vunpack.c.h.b16 %v436
        %v2043 = vunpack.c.l.b16 %v437
        %v2044 = vunpack.c.h.b16 %v437
        %v2045 = vunpack.c.l.b16 %v438
        %v2046 = vunpack.c.h.b16 %v438
        %v2047 = vunpack.c.l.b16 %v439
        %v2048 = vunpack.c.h.b16 %v439
        %v2049 = vunpack.c.l.b16 %v440
        %v2050 = vunpack.c.h.b16 %v440
        %v2051 = vunpack.c.l.b16 %v441
        %v2052 = vunpack.c.h.b16 %v441
        %v2053 = vunpack.c.l.b16 %v442
        %v2054 = vunpack.c.h.b16 %v442
        %v2055 = vunpack.c.l.b16 %v443
        %v2056 = vunpack.c.h.b16 %v443
        %v2057 = vunpack.c.l.b16 %v444
        %v2058 = vunpack.c.h.b16 %v444
        %v2059 = vunpack.c.l.b16 %v445
        %v2060 = vunpack.c.h.b16 %v445
        %v2061 = vunpack.c.l.b16 %v446
        %v2062 = vunpack.c.h.b16 %v446
        %v2063 = vunpack.c.l.b16 %v447
        %v2064 = vunpack.c.h.b16 %v447
        %v2065 = vunpack.c.l.b16 %v448
        %v2066 = vunpack.c.h.b16 %v448
        %v2067 = vunpack.c.l.b16 %v449
        %v2068 = vunpack.c.h.b16 %v449
        %v2069 = vunpack.c.l.b16 %v450
        %v2070 = vunpack.c.h.b16 %v450
        %v2071 = vunpack.c.l.b16 %v451
        %v2072 = vunpack.c.h.b16 %v451
        %v2073 = vunpack.c.l.b16 %v452
        %v2074 = vunpack.c.h.b16 %v452
        %v2075 = vunpack.c.l.b16 %v453
        %v2076 = vunpack.c.h.b16 %v453
        %v2077 = vunpack.c.l.b16 %v454
        %v2078 = vunpack.c.h.b16 %v454
        %v2079 = vunpack.c.l.b16 %v455
        %v2080 = vunpack.c.h.b16 %v455
        %v2081 = vunpack.c.l.b16 %v456
        %v2082 = vunpack.c.h.b16 %v456
        %v2083 = vunpack.c.l.b16 %v457
        %v2084 = vunpack.c.h.b16 %v457
        %v2085 = vunpack.c.l.b16 %v458
        %v2086 = vunpack.c.h.b16 %v458
        %v2087 = vunpack.c.l.b16 %v459
        %v2088 = vunpack.c.h.b16 %v459
        %v2089 = vunpack.c.l.b16 %v460
        %v2090 = vunpack.c.h.b16 %v460
        %v2091 = vunpack.c.l.b16 %v461
        %v2092 = vunpack.c.h.b16 %v461
        %v2093 = vunpack.c.l.b16 %v462
        %v2094 = vunpack.c.h.b16 %v462
        %v2095 = vunpack.c.l.b16 %v463
        %v2096 = vunpack.c.h.b16 %v463
        %v2097 = vunpack.c.l.b16 %v464
        %v2098 = vunpack.c.h.b16 %v464
        %v2099 = vunpack.c.l.b16 %v465
        %v2100 = vunpack.c.h.b16 %v465
        %v2101 = vunpack.c.l.b16 %v466
        %v2102 = vunpack.c.h.b16 %v466
        %v2103 = vunpack.c.l.b16 %v467
        %v2104 = vunpack.c.h.b16 %v467
        %v2105 = vunpack.c.l.b16 %v468
        %v2106 = vunpack.c.h.b16 %v468
        %v2107 = vunpack.c.l.b16 %v469
        %v2108 = vunpack.c.h.b16 %v469
        %v2109 = vunpack.c.l.b16 %v470
        %v2110 = vunpack.c.h.b16 %v470
        %v2111 = vunpack.c.l.b16 %v471
        %v2112 = vunpack.c.h.b16 %v471
        %v2113 = vunpack.c.l.b16 %v472
        %v2114 = vunpack.c.h.b16 %v472
        %v2115 = vunpack.c.l.b16 %v473
        %v2116 = vunpack.c.h.b16 %v473
        %v2117 = vunpack.c.l.b16 %v474
        %v2118 = vunpack.c.h.b16 %v474
        %v2119 = vunpack.c.l.b16 %v475
        %v2120 = vunpack.c.h.b16 %v475
        %v2121 = vunpack.c.l.b16 %v476
        %v2122 = vunpack.c.h.b16 %v476
        %v2123 = vunpack.c.l.b16 %v477
        %v2124 = vunpack.c.h.b16 %v477
        %v2125 = vunpack.c.l.b16 %v478
        %v2126 = vunpack.c.h.b16 %v478
        %v2127 = vunpack.c.l.b16 %v479
        %v2128 = vunpack.c.h.b16 %v479
        %v2129 = vunpack.c.l.b16 %v480
        %v2130 = vunpack.c.h.b16 %v480
        %v2131 = vpack.c.b16 %v1845, %v1843
        %v2132 = vpack.c.b16 %v1846, %v1844
        %v2133 = vpack.c.b16 %v1849, %v1847
        %v2134 = vpack.c.b16 %v1850, %v1848
        %v2135 = vpack.c.b16 %v1853, %v1851
        %v2136 = vpack.c.b16 %v1854, %v1852
        %v2137 = vpack.c.b16 %v1857, %v1855
        %v2138 = vpack.c.b16 %v1858, %v1856
        %v2139 = vpack.c.b16 %v1861, %v1859
        %v2140 = vpack.c.b16 %v1862, %v1860
        %v2141 = vpack.c.b16 %v1865, %v1863
        %v2142 = vpack.c.b16 %v1866, %v1864
        %v2143 = vpack.c.b16 %v1869, %v1867
        %v2144 = vpack.c.b16 %v1870, %v1868
        %v2145 = vpack.c.b16 %v1873, %v1871
        %v2146 = vpack.c.b16 %v1874, %v1872
        %v2147 = vpack.c.b16 %v1877, %v1875
        %v2148 = vpack.c.b16 %v1878, %v1876
        %v2149 = vpack.c.b16 %v1881, %v1879
        %v2150 = vpack.c.b16 %v1882, %v1880
        %v2151 = vpack.c.b16 %v1885, %v1883
        %v2152 = vpack.c.b16 %v1886, %v1884
        %v2153 = vpack.c.b16 %v1889, %v1887
        %v2154 = vpack.c.b16 %v1890, %v1888
        %v2155 = vpack.c.b16 %v1893, %v1891
        %v2156 = vpack.c.b16 %v1894, %v1892
        %v2157 = vpack.c.b16 %v1897, %v1895
        %v2158 = vpack.c.b16 %v1898, %v1896
        %v2159 = vpack.c.b16 %v1901, %v1899
        %v2160 = vpack.c.b16 %v1902, %v1900
        %v2161 = vpack.c.b16 %v1905, %v1903
        %v2162 = vpack.c.b16 %v1906, %v1904
        %v2163 = vpack.c.b16 %v1909, %v1907
        %v2164 = vpack.c.b16 %v1910, %v1908
        %v2165 = vpack.c.b16 %v1913, %v1911
        %v2166 = vpack.c.b16 %v1914, %v1912
        %v2167 = vpack.c.b16 %v1917, %v1915
        %v2168 = vpack.c.b16 %v1918, %v1916
        %v2169 = vpack.c.b16 %v1921, %v1919
        %v2170 = vpack.c.b16 %v1922, %v1920
        %v2171 = vpack.c.b16 %v1925, %v1923
        %v2172 = vpack.c.b16 %v1926, %v1924
        %v2173 = vpack.c.b16 %v1929, %v1927
        %v2174 = vpack.c.b16 %v1930, %v1928
        %v2175 = vpack.c.b16 %v1933, %v1931
        %v2176 = vpack.c.b16 %v1934, %v1932
        %v2177 = vpack.c.b16 %v1937, %v1935
        %v2178 = vpack.c.b16 %v1938, %v1936
        %v2179 = vpack.c.b16 %v1941, %v1939
        %v2180 = vpack.c.b16 %v1942, %v1940
        %v2181 = vpack.c.b16 %v1945, %v1943
        %v2182 = vpack.c.b16 %v1946, %v1944
        %v2183 = vpack.c.b16 %v1949, %v1947
        %v2184 = vpack.c.b16 %v1950, %v1948
        %v2185 = vpack.c.b16 %v1953, %v1951
        %v2186 = vpack.c.b16 %v1954, %v1952
        %v2187 = vpack.c.b16 %v1957, %v1955
        %v2188 = vpack.c.b16 %v1958, %v1956
        %v2189 = vpack.c.b16 %v1961, %v1959
        %v2190 = vpack.c.b16 %v1962, %v1960
        %v2191 = vpack.c.b16 %v1965, %v1963
        %v2192 = vpack.c.b16 %v1966, %v1964
        %v2193 = vpack.c.b16 %v1969, %v1967
        %v2194 = vpack.c.b16 %v1970, %v1968
        %v2195 = vpack.c.b16 %v1973, %v1971
        %v2196 = vpack.c.b16 %v1974, %v1972
        %v2197 = vpack.c.b16 %v1977, %v1975
        %v2198 = vpack.c.b16 %v1978, %v1976
        %v2199 = vpack.c.b16 %v1981, %v1979
        %v2200 = vpack.c.b16 %v1982, %v1980
        %v2201 = vpack.c.b16 %v1985, %v1983
        %v2202 = vpack.c.b16 %v1986, %v1984
        %v2203 = vpack.c.b16 %v1989, %v1987
        %v2204 = vpack.c.b16 %v1990, %v1988
        %v2205 = vpack.c.b16 %v1993, %v1991
        %v2206 = vpack.c.b16 %v1994, %v1992
        %v2207 = vpack.c.b16 %v1997, %v1995
        %v2208 = vpack.c.b16 %v1998, %v1996
        %v2209 = vpack.c.b16 %v2001, %v1999
        %v2210 = vpack.c.b16 %v2002, %v2000
        %v2211 = vpack.c.b16 %v2005, %v2003
        %v2212 = vpack.c.b16 %v2006, %v2004
        %v2213 = vpack.c.b16 %v2009, %v2007
        %v2214 = vpack.c.b16 %v2010, %v2008
        %v2215 = vpack.c.b16 %v2013, %v2011
        %v2216 = vpack.c.b16 %v2014, %v2012
        %v2217 = vpack.c.b16 %v2017, %v2015
        %v2218 = vpack.c.b16 %v2018, %v2016
        %v2219 = vpack.c.b16 %v2021, %v2019
        %v2220 = vpack.c.b16 %v2022, %v2020
        %v2221 = vpack.c.b16 %v2025, %v2023
        %v2222 = vpack.c.b16 %v2026, %v2024
        %v2223 = vpack.c.b16 %v2029, %v2027
        %v2224 = vpack.c.b16 %v2030, %v2028
        %v2225 = vpack.c.b16 %v2033, %v2031
        %v2226 = vpack.c.b16 %v2034, %v2032
        %v2227 = vpack.c.b16 %v2037, %v2035
        %v2228 = vpack.c.b16 %v2038, %v2036
        %v2229 = vpack.c.b16 %v2041, %v2039
        %v2230 = vpack.c.b16 %v2042, %v2040
        %v2231 = vpack.c.b16 %v2045, %v2043
        %v2232 = vpack.c.b16 %v2046, %v2044
        %v2233 = vpack.c.b16 %v2049, %v2047
        %v2234 = vpack.c.b16 %v2050, %v2048
        %v2235 = vpack.c.b16 %v2053, %v2051
        %v2236 = vpack.c.b16 %v2054, %v2052
        %v2237 = vpack.c.b16 %v2057, %v2055
        %v2238 = vpack.c.b16 %v2058, %v2056
        %v2239 = vpack.c.b16 %v2061, %v2059
        %v2240 = vpack.c.b16 %v2062, %v2060
        %v2241 = vpack.c.b16 %v2065, %v2063
        %v2242 = vpack.c.b16 %v2066, %v2064
        %v2243 = vpack.c.b16 %v2069, %v2067
        %v2244 = vpack.c.b16 %v2070, %v2068
        %v2245 = vpack.c.b16 %v2073, %v2071
        %v2246 = vpack.c.b16 %v2074, %v2072
        %v2247 = vpack.c.b16 %v2077, %v2075
        %v2248 = vpack.c.b16 %v2078, %v2076
        %v2249 = vpack.c.b16 %v2081, %v2079
        %v2250 = vpack.c.b16 %v2082, %v2080
        %v2251 = vpack.c.b16 %v2085, %v2083
        %v2252 = vpack.c.b16 %v2086, %v2084
        %v2253 = vpack.c.b16 %v2089, %v2087
        %v2254 = vpack.c.b16 %v2090, %v2088
        %v2255 = vpack.c.b16 %v2093, %v2091
        %v2256 = vpack.c.b16 %v2094, %v2092
        %v2257 = vpack.c.b16 %v2097, %v2095
        %v2258 = vpack.c.b16 %v2098, %v2096
        %v2259 = vpack.c.b16 %v2101, %v2099
        %v2260 = vpack.c.b16 %v2102, %v2100
        %v2261 = vpack.c.b16 %v2105, %v2103
        %v2262 = vpack.c.b16 %v2106, %v2104
        %v2263 = vpack.c.b16 %v2109, %v2107
        %v2264 = vpack.c.b16 %v2110, %v2108
        %v2265 = vpack.c.b16 %v2113, %v2111
        %v2266 = vpack.c.b16 %v2114, %v2112
        %v2267 = vpack.c.b16 %v2117, %v2115
        %v2268 = vpack.c.b16 %v2118, %v2116
        %v2269 = vpack.c.b16 %v2121, %v2119
        %v2270 = vpack.c.b16 %v2122, %v2120
        %v2271 = vpack.c.b16 %v2125, %v2123
        %v2272 = vpack.c.b16 %v2126, %v2124
        %v2273 = vpack.c.b16 %v2129, %v2127
        %v2274 = vpack.c.b16 %v2130, %v2128
        %2419 = vmatpush.bf16.msra.mxu0 %v2145
        %2420 = vmatpush.bf16.msra.mxu0 %v2143
        %2421 = vmatpush.bf16.msra.mxu0 %v2141
        %2422 = vmatpush.bf16.msra.mxu0 %v2139
        %2423 = vmatpush.bf16.msra.mxu0 %v2137
        %2424 = vmatpush.bf16.msra.mxu0 %v2135
        %2425 = vmatpush.bf16.msra.mxu0 %v2133
        %2426 = vmatpush.bf16.msra.mxu0 %v2131
        %2427 = vmatmul.bf16.gmra.mxu0 %v1681
        %v2428 = vpop.f32.mrf.mxu0
        %v2429 = vadd.f32 %v1523, %v2428
        %v2430 = vpop.f32.mrf.mxu0
        %v2431 = vadd.f32 %v1525, %v2430
        %2432 = vdwg.mxu0
        %2433 = vmatpush.bf16.msra.mxu0 %v2161
        %2434 = vmatpush.bf16.msra.mxu0 %v2159
        %2435 = vmatpush.bf16.msra.mxu0 %v2157
        %2436 = vmatpush.bf16.msra.mxu0 %v2155
        %2437 = vmatpush.bf16.msra.mxu0 %v2153
        %2438 = vmatpush.bf16.msra.mxu0 %v2151
        %2439 = vmatpush.bf16.msra.mxu0 %v2149
        %2440 = vmatpush.bf16.msra.mxu0 %v2147
        %2441 = vmatmul.bf16.gmra.mxu0 %v1682
        %v2442 = vpop.f32.mrf.mxu0
        %v2443 = vadd.f32 %v2429, %v2442
        %v2444 = vpop.f32.mrf.mxu0
        %v2445 = vadd.f32 %v2431, %v2444
        %2446 = vdwg.mxu0
        %2447 = vmatpush.bf16.msra.mxu0 %v2177
        %2448 = vmatpush.bf16.msra.mxu0 %v2175
        %2449 = vmatpush.bf16.msra.mxu0 %v2173
        %2450 = vmatpush.bf16.msra.mxu0 %v2171
        %2451 = vmatpush.bf16.msra.mxu0 %v2169
        %2452 = vmatpush.bf16.msra.mxu0 %v2167
        %2453 = vmatpush.bf16.msra.mxu0 %v2165
        %2454 = vmatpush.bf16.msra.mxu0 %v2163
        %2455 = vmatmul.bf16.gmra.mxu0 %v1683
        %v2456 = vpop.f32.mrf.mxu0
        %v2457 = vadd.f32 %v2443, %v2456
        %v2458 = vpop.f32.mrf.mxu0
        %v2459 = vadd.f32 %v2445, %v2458
        %2460 = vdwg.mxu0
        %2461 = vmatpush.bf16.msra.mxu0 %v2193
        %2462 = vmatpush.bf16.msra.mxu0 %v2191
        %2463 = vmatpush.bf16.msra.mxu0 %v2189
        %2464 = vmatpush.bf16.msra.mxu0 %v2187
        %2465 = vmatpush.bf16.msra.mxu0 %v2185
        %2466 = vmatpush.bf16.msra.mxu0 %v2183
        %2467 = vmatpush.bf16.msra.mxu0 %v2181
        %2468 = vmatpush.bf16.msra.mxu0 %v2179
        %2469 = vmatmul.bf16.gmra.mxu0 %v1684
        %v2470 = vpop.f32.mrf.mxu0
        %v2471 = vadd.f32 %v2457, %v2470
        %v2472 = vpop.f32.mrf.mxu0
        %v2473 = vadd.f32 %v2459, %v2472
        %2474 = vdwg.mxu0
        %2475 = vmatpush.bf16.msra.mxu0 %v2209
        %2476 = vmatpush.bf16.msra.mxu0 %v2207
        %2477 = vmatpush.bf16.msra.mxu0 %v2205
        %2478 = vmatpush.bf16.msra.mxu0 %v2203
        %2479 = vmatpush.bf16.msra.mxu0 %v2201
        %2480 = vmatpush.bf16.msra.mxu0 %v2199
        %2481 = vmatpush.bf16.msra.mxu0 %v2197
        %2482 = vmatpush.bf16.msra.mxu0 %v2195
        %2483 = vmatmul.bf16.gmra.mxu0 %v1685
        %v2484 = vpop.f32.mrf.mxu0
        %v2485 = vadd.f32 %v2471, %v2484
        %v2486 = vpop.f32.mrf.mxu0
        %v2487 = vadd.f32 %v2473, %v2486
        %2488 = vdwg.mxu0
        %2489 = vmatpush.bf16.msra.mxu0 %v2225
        %2490 = vmatpush.bf16.msra.mxu0 %v2223
        %2491 = vmatpush.bf16.msra.mxu0 %v2221
        %2492 = vmatpush.bf16.msra.mxu0 %v2219
        %2493 = vmatpush.bf16.msra.mxu0 %v2217
        %2494 = vmatpush.bf16.msra.mxu0 %v2215
        %2495 = vmatpush.bf16.msra.mxu0 %v2213
        %2496 = vmatpush.bf16.msra.mxu0 %v2211
        %2497 = vmatmul.bf16.gmra.mxu0 %v1686
        %v2498 = vpop.f32.mrf.mxu0
        %v2499 = vadd.f32 %v2485, %v2498
        %v2500 = vpop.f32.mrf.mxu0
        %v2501 = vadd.f32 %v2487, %v2500
        %2502 = vdwg.mxu0
        %2503 = vmatpush.bf16.msra.mxu0 %v2241
        %2504 = vmatpush.bf16.msra.mxu0 %v2239
        %2505 = vmatpush.bf16.msra.mxu0 %v2237
        %2506 = vmatpush.bf16.msra.mxu0 %v2235
        %2507 = vmatpush.bf16.msra.mxu0 %v2233
        %2508 = vmatpush.bf16.msra.mxu0 %v2231
        %2509 = vmatpush.bf16.msra.mxu0 %v2229
        %2510 = vmatpush.bf16.msra.mxu0 %v2227
        %2511 = vmatmul.bf16.gmra.mxu0 %v1687
        %v2512 = vpop.f32.mrf.mxu0
        %v2513 = vadd.f32 %v2499, %v2512
        %v2514 = vpop.f32.mrf.mxu0
        %v2515 = vadd.f32 %v2501, %v2514
        %2516 = vdwg.mxu0
        %2517 = vmatpush.bf16.msra.mxu0 %v2257
        %2518 = vmatpush.bf16.msra.mxu0 %v2255
        %2519 = vmatpush.bf16.msra.mxu0 %v2253
        %2520 = vmatpush.bf16.msra.mxu0 %v2251
        %2521 = vmatpush.bf16.msra.mxu0 %v2249
        %2522 = vmatpush.bf16.msra.mxu0 %v2247
        %2523 = vmatpush.bf16.msra.mxu0 %v2245
        %2524 = vmatpush.bf16.msra.mxu0 %v2243
        %2525 = vmatmul.bf16.gmra.mxu0 %v1688
        %v2526 = vpop.f32.mrf.mxu0
        %v2527 = vadd.f32 %v2513, %v2526
        %v2528 = vpop.f32.mrf.mxu0
        %v2529 = vadd.f32 %v2515, %v2528
        %2530 = vdwg.mxu0
        %2531 = vmatpush.bf16.msra.mxu0 %v2273
        %2532 = vmatpush.bf16.msra.mxu0 %v2271
        %2533 = vmatpush.bf16.msra.mxu0 %v2269
        %2534 = vmatpush.bf16.msra.mxu0 %v2267
        %2535 = vmatpush.bf16.msra.mxu0 %v2265
        %2536 = vmatpush.bf16.msra.mxu0 %v2263
        %2537 = vmatpush.bf16.msra.mxu0 %v2261
        %2538 = vmatpush.bf16.msra.mxu0 %v2259
        %2539 = vmatmul.bf16.gmra.mxu0 %v1689
        %v2540 = vpop.f32.mrf.mxu0
        %v2541 = vadd.f32 %v2527, %v2540
        %v2542 = vpop.f32.mrf.mxu0
        %v2543 = vadd.f32 %v2529, %v2542
        %2544 = vdwg.mxu0
        %2545 = vmatpush.bf16.msra.mxu0 %v2146
        %2546 = vmatpush.bf16.msra.mxu0 %v2144
        %2547 = vmatpush.bf16.msra.mxu0 %v2142
        %2548 = vmatpush.bf16.msra.mxu0 %v2140
        %2549 = vmatpush.bf16.msra.mxu0 %v2138
        %2550 = vmatpush.bf16.msra.mxu0 %v2136
        %2551 = vmatpush.bf16.msra.mxu0 %v2134
        %2552 = vmatpush.bf16.msra.mxu0 %v2132
        %2553 = vmatmul.bf16.gmra.mxu0 %v1681
        %v2554 = vpop.f32.mrf.mxu0
        %v2555 = vadd.f32 %v1649, %v2554
        %v2556 = vpop.f32.mrf.mxu0
        %v2557 = vadd.f32 %v1651, %v2556
        %2558 = vdwg.mxu0
        %2559 = vmatpush.bf16.msra.mxu0 %v2162
        %2560 = vmatpush.bf16.msra.mxu0 %v2160
        %2561 = vmatpush.bf16.msra.mxu0 %v2158
        %2562 = vmatpush.bf16.msra.mxu0 %v2156
        %2563 = vmatpush.bf16.msra.mxu0 %v2154
        %2564 = vmatpush.bf16.msra.mxu0 %v2152
        %2565 = vmatpush.bf16.msra.mxu0 %v2150
        %2566 = vmatpush.bf16.msra.mxu0 %v2148
        %2567 = vmatmul.bf16.gmra.mxu0 %v1682
        %v2568 = vpop.f32.mrf.mxu0
        %v2569 = vadd.f32 %v2555, %v2568
        %v2570 = vpop.f32.mrf.mxu0
        %v2571 = vadd.f32 %v2557, %v2570
        %2572 = vdwg.mxu0
        %2573 = vmatpush.bf16.msra.mxu0 %v2178
        %2574 = vmatpush.bf16.msra.mxu0 %v2176
        %2575 = vmatpush.bf16.msra.mxu0 %v2174
        %2576 = vmatpush.bf16.msra.mxu0 %v2172
        %2577 = vmatpush.bf16.msra.mxu0 %v2170
        %2578 = vmatpush.bf16.msra.mxu0 %v2168
        %2579 = vmatpush.bf16.msra.mxu0 %v2166
        %2580 = vmatpush.bf16.msra.mxu0 %v2164
        %2581 = vmatmul.bf16.gmra.mxu0 %v1683
        %v2582 = vpop.f32.mrf.mxu0
        %v2583 = vadd.f32 %v2569, %v2582
        %v2584 = vpop.f32.mrf.mxu0
        %v2585 = vadd.f32 %v2571, %v2584
        %2586 = vdwg.mxu0
        %2587 = vmatpush.bf16.msra.mxu0 %v2194
        %2588 = vmatpush.bf16.msra.mxu0 %v2192
        %2589 = vmatpush.bf16.msra.mxu0 %v2190
        %2590 = vmatpush.bf16.msra.mxu0 %v2188
        %2591 = vmatpush.bf16.msra.mxu0 %v2186
        %2592 = vmatpush.bf16.msra.mxu0 %v2184
        %2593 = vmatpush.bf16.msra.mxu0 %v2182
        %2594 = vmatpush.bf16.msra.mxu0 %v2180
        %2595 = vmatmul.bf16.gmra.mxu0 %v1684
        %v2596 = vpop.f32.mrf.mxu0
        %v2597 = vadd.f32 %v2583, %v2596
        %v2598 = vpop.f32.mrf.mxu0
        %v2599 = vadd.f32 %v2585, %v2598
        %2600 = vdwg.mxu0
        %2601 = vmatpush.bf16.msra.mxu0 %v2210
        %2602 = vmatpush.bf16.msra.mxu0 %v2208
        %2603 = vmatpush.bf16.msra.mxu0 %v2206
        %2604 = vmatpush.bf16.msra.mxu0 %v2204
        %2605 = vmatpush.bf16.msra.mxu0 %v2202
        %2606 = vmatpush.bf16.msra.mxu0 %v2200
        %2607 = vmatpush.bf16.msra.mxu0 %v2198
        %2608 = vmatpush.bf16.msra.mxu0 %v2196
        %2609 = vmatmul.bf16.gmra.mxu0 %v1685
        %v2610 = vpop.f32.mrf.mxu0
        %v2611 = vadd.f32 %v2597, %v2610
        %v2612 = vpop.f32.mrf.mxu0
        %v2613 = vadd.f32 %v2599, %v2612
        %2614 = vdwg.mxu0
        %2615 = vmatpush.bf16.msra.mxu0 %v2226
        %2616 = vmatpush.bf16.msra.mxu0 %v2224
        %2617 = vmatpush.bf16.msra.mxu0 %v2222
        %2618 = vmatpush.bf16.msra.mxu0 %v2220
        %2619 = vmatpush.bf16.msra.mxu0 %v2218
        %2620 = vmatpush.bf16.msra.mxu0 %v2216
        %2621 = vmatpush.bf16.msra.mxu0 %v2214
        %2622 = vmatpush.bf16.msra.mxu0 %v2212
        %2623 = vmatmul.bf16.gmra.mxu0 %v1686
        %v2624 = vpop.f32.mrf.mxu0
        %v2625 = vadd.f32 %v2611, %v2624
        %v2626 = vpop.f32.mrf.mxu0
        %v2627 = vadd.f32 %v2613, %v2626
        %2628 = vdwg.mxu0
        %2629 = vmatpush.bf16.msra.mxu0 %v2242
        %2630 = vmatpush.bf16.msra.mxu0 %v2240
        %2631 = vmatpush.bf16.msra.mxu0 %v2238
        %2632 = vmatpush.bf16.msra.mxu0 %v2236
        %2633 = vmatpush.bf16.msra.mxu0 %v2234
        %2634 = vmatpush.bf16.msra.mxu0 %v2232
        %2635 = vmatpush.bf16.msra.mxu0 %v2230
        %2636 = vmatpush.bf16.msra.mxu0 %v2228
        %2637 = vmatmul.bf16.gmra.mxu0 %v1687
        %v2638 = vpop.f32.mrf.mxu0
        %v2639 = vadd.f32 %v2625, %v2638
        %v2640 = vpop.f32.mrf.mxu0
        %v2641 = vadd.f32 %v2627, %v2640
        %2642 = vdwg.mxu0
        %2643 = vmatpush.bf16.msra.mxu0 %v2258
        %2644 = vmatpush.bf16.msra.mxu0 %v2256
        %2645 = vmatpush.bf16.msra.mxu0 %v2254
        %2646 = vmatpush.bf16.msra.mxu0 %v2252
        %2647 = vmatpush.bf16.msra.mxu0 %v2250
        %2648 = vmatpush.bf16.msra.mxu0 %v2248
        %2649 = vmatpush.bf16.msra.mxu0 %v2246
        %2650 = vmatpush.bf16.msra.mxu0 %v2244
        %2651 = vmatmul.bf16.gmra.mxu0 %v1688
        %v2652 = vpop.f32.mrf.mxu0
        %v2653 = vadd.f32 %v2639, %v2652
        %v2654 = vpop.f32.mrf.mxu0
        %v2655 = vadd.f32 %v2641, %v2654
        %2656 = vdwg.mxu0
        %2657 = vmatpush.bf16.msra.mxu0 %v2274
        %2658 = vmatpush.bf16.msra.mxu0 %v2272
        %2659 = vmatpush.bf16.msra.mxu0 %v2270
        %2660 = vmatpush.bf16.msra.mxu0 %v2268
        %2661 = vmatpush.bf16.msra.mxu0 %v2266
        %2662 = vmatpush.bf16.msra.mxu0 %v2264
        %2663 = vmatpush.bf16.msra.mxu0 %v2262
        %2664 = vmatpush.bf16.msra.mxu0 %v2260
        %2665 = vmatmul.bf16.gmra.mxu0 %v1689
        %v2666 = vpop.f32.mrf.mxu0
        %v2667 = vadd.f32 %v2653, %v2666
        %v2668 = vpop.f32.mrf.mxu0
        %v2669 = vadd.f32 %v2655, %v2668
        %2670 = vdwg.mxu0
        %2671 = vst [vmem:[%s319] sm:$0xff] %v2541
        %2672 = vst [vmem:[%s319 + $0x8] sm:$0xff] %v2667
        %2673 = vst [vmem:[%s319 + $0x10] sm:$0xff] %v2543
        %2674 = vst [vmem:[%s319 + $0x18] sm:$0xff] %v2669
        %s2675 = sand.u32 %s147, 1
        %s2676 = scalar_lea.sflag [#allocation4], %s2675
        %s2677 = sand.u32 %s147, 1
        %s2678 = smul.addr %s2677, 32
        %s2679 = scalar_lea.vmem [#allocation10], %s2678
        // Predicated region
        $region53: #{tpu_custom_call.1} parent=35 // pred_check
          %p2680 = pneg %p157
        $region54: #{tpu_custom_call.1} parent=35 // pred_check_branch
          %2682 = sbr.rel (%p2680) target = $region56
        $region55: #{tpu_custom_call.1} parent=35 // pred_region
          %s2683 = smul.u32 2, %s29
          %s2684 = smul.u32 2, %s30
          %2686 = vsyncadd %s2676, 0
          %s2687 = smul.addr %s2683, 4
          %s2688 = sadd.s32 %s2684, %s2687
          %s2689 = smul.addr %s2688, 8
          %s2690 = scalar_lea.hbm %s4, %s2689
          %s2691 = sshll.u32 %s2679, 4
          %s2692 = int_to_ptr.vmem [resolvable:$true] %s2691
          %s2693 = sshll.u32 %s2690, 4
          %s2694 = int_to_ptr.hbm [resolvable:$true] %s2693
          %2699 = dma.vmem_to_hbm [thread:$0]  %s2692, 512, %s2694, %s2676, 256, 512, 16
        $region56: #{tpu_custom_call.1} parent=35 // pred_fallthru
          _
      $region36: #{tpu_custom_call.1} parent=5 // pred_fallthru
        _
      %p2700 = scmp.le.s32.totalorder 2, %s20
      // Predicated region
      $region57: #{tpu_custom_call.1} parent=5 // pred_check
        %p2701 = pneg %p2700
      $region58: #{tpu_custom_call.1} parent=5 // pred_check_branch
        %2703 = sbr.rel (%p2701) target = $region60
      $region59: #{tpu_custom_call.1} parent=5 // pred_region
        %s2704 = ssub.s32 %s20, 2
        // Predicated region
        $region61: #{tpu_custom_call.1} parent=59 // pred_check
          %p2705 = pneg %p163
        $region62: #{tpu_custom_call.1} parent=59 // pred_check_branch
          %2707 = sbr.rel (%p2705) target = $region64
        $region63: #{tpu_custom_call.1} parent=59 // pred_region
          %s2708 = sand.u32 %s148, 1
          %s2709 = scalar_lea.sflag [#allocation4], %s2708
          %s2710 = sand.u32 %s148, 1
          %s2711 = smul.addr %s2710, 32
          %s2712 = scalar_lea.vmem [#allocation10], %s2711
          %2714 = dma.done %s2709, 512
        $region64: #{tpu_custom_call.1} parent=59 // pred_fallthru
          _
      $region60: #{tpu_custom_call.1} parent=5 // pred_fallthru
        _
    $region6: #{tpu_custom_call.1} parent=1 // loop_footer
      %s24 = sadd.s32 1, %s20
    $region7: #{tpu_custom_call.1} parent=1 // loop_footer_branch
      %19 = sbr.rel target = $region3
    $region8: #{tpu_custom_call.1} parent=1 // loop_exit
      _
    %2715 = vsyncpa [#allocation3], 1
    %s2716 = scalar_lea.sflag [#allocation3], 1
    %2717 = vsyncpa %s2716, 1
    %2718 = vsyncpa [#allocation6], 1
    %s2719 = scalar_lea.sflag [#allocation6], 1
    %2720 = vsyncpa %s2719, 1
    %2721 = vsyncpa [#allocation9], 1
    %2722 = vsyncpa [#allocation4], 1
    %s2723 = scalar_lea.sflag [#allocation4], 1
    %2724 = vsyncpa %s2723, 1

</llo_original>
